<compile_context>
chip_gen: v7x
topology: tpu7x:2x2x1
jax: 0.10.0
libtpu: 0.0.40
codegen_flags: <defaults>
</compile_context>

<pallas_src>
import math

import jax
import jax.numpy as jnp
from jax.experimental import pallas as pl
from jax.experimental.pallas import tpu as pltpu

# ---------------- synthetic config (small shapes) ----------------
VOCAB = 50
HIDDEN = 32
NUM_HEADS = 2
NUM_LAYERS = 2
INTERMEDIATE = 64
MAX_POS = 64
NUM_LABELS = 5
SEP_TOKEN_ID = 3
LN_EPS = 1e-12
SUBLANE = 8

# packed, lane-dense (B, 128) output slab layout
HEAD_PROJ_W = 96            # width of the packed task-head projection
OUT_W = 128                 # heads (96) | pooled (32)
SENT_COL = 0                # cols 0:5   sentiment logits
PARA_COL = NUM_LABELS       # col  5     paraphrase logit
SIMI_COL = NUM_LABELS + 1   # col  6     proj_simi logit (exists in __init__, unused in forward)
COS_COL = NUM_LABELS + 2    # col  7     cosine-ReLU*5 similarity (rows [0:npairs])
QKV_W = 128                 # fused q|k|v projection width, padded 96 -> 128 lanes


def _gelu(x):
    # TODO(synk): exact erf-based GELU (BERT default) — tanh approximation used since erf
    #             lowering on Mosaic is not guaranteed.
    return 0.5 * x * (1.0 + jnp.tanh(0.7978845608028654 * (x + 0.044715 * x * x * x)))


# order of weight arrays passed to the fused kernel (must match kernel signature)
WEIGHT_ORDER = (
    "emb_ln_g", "emb_ln_b",
    "wqkv", "bqkv", "wo", "bo",
    "ln1_g", "ln1_b", "wi", "bi", "wf", "bf", "ln2_g", "ln2_b",
    "pool_w", "pool_b", "head_w", "head_b",
)
PER_LAYER = frozenset({"wqkv", "bqkv", "wo", "bo", "ln1_g", "ln1_b",
                       "wi", "bi", "wf", "bf", "ln2_g", "ln2_b"})


# ---------------- fused BERT forward kernel ----------------
def make_fused_bert_kernel(BT, S, H, nh, L, compute_cosine, npairs):
    dh = H // nh
    scale = 1.0 / math.sqrt(dh)
    R = BT * S
    bf16 = jnp.bfloat16
    f32 = jnp.float32
    inv_h = 1.0 / H

    def ln(x, g, b):
        # single-pass stats: var = E[x^2] - E[x]^2 -> one dependent cross-lane chain, not two
        s1 = jnp.sum(x, axis=-1, keepdims=True)
        s2 = jnp.sum(x * x, axis=-1, keepdims=True)
        mean = s1 * inv_h
        var = s2 * inv_h - mean * mean
        return (x - mean) * jax.lax.rsqrt(var + LN_EPS) * g + b

    def kernel(emb_ref, mask_ref,
               eg_ref, eb_ref,
               wqkv_ref, bqkv_ref, wo_ref, bo_ref,
               ln1g_ref, ln1b_ref, wi_ref, bi_ref, wf_ref, bf_ref,
               ln2g_ref, ln2b_ref,
               pw_ref, pb_ref, hw_ref, hb_ref,
               out_ref, x_scr):
        l = pl.program_id(1)

        # ----- embedding LayerNorm (first layer iteration only) -----
        @pl.when(l == 0)
        def _():
            x_scr[...] = ln(emb_ref[...].reshape(R, H), eg_ref[...], eb_ref[...])

        x = x_scr[...]                                           # (R, H) f32, VMEM-resident
        xb = x.astype(bf16)

        # ----- fused QKV projection: one (R,H)@(H,128) matmul per layer -----
        qkv = jnp.dot(xb, wqkv_ref[0], preferred_element_type=f32) + bqkv_ref[0]
        q = qkv[:, 0:H] * scale                                  # fold 1/sqrt(dh) into q once
        k = qkv[:, H:2 * H]
        v = qkv[:, 2 * H:3 * H]
        q3 = q.reshape(BT, S, H)
        k3 = k.reshape(BT, S, H)
        v3 = v.reshape(BT, S, H)
        mask = mask_ref[...]                                     # (BT, 1, S) additive

        # ----- attention; per-head output projection (no lane concat of ctx) -----
        wo_l = wo_ref[0]                                         # (H, H) bf16
        attn = jnp.zeros((R, H), f32)
        for h in range(nh):                                      # static head loop (nh=2)
            sl = slice(h * dh, (h + 1) * dh)
            s = jnp.einsum("bqd,bkd->bqk",
                           q3[:, :, sl].astype(bf16), k3[:, :, sl].astype(bf16),
                           preferred_element_type=f32) + mask
            s = s - jnp.max(s, axis=-1, keepdims=True)
            e = jnp.exp(s)
            p = e * pl.reciprocal(jnp.sum(e, axis=-1, keepdims=True), approx=True)
            ctx_h = jnp.einsum("bqk,bkd->bqd",
                               p.astype(bf16), v3[:, :, sl].astype(bf16),
                               preferred_element_type=f32).reshape(R, dh)
            attn = attn + jnp.dot(ctx_h.astype(bf16), wo_l[sl, :],
                                  preferred_element_type=f32)
        attn = attn + bo_ref[0]

        h1 = ln(attn + x, ln1g_ref[0], ln1b_ref[0])
        inter = _gelu(jnp.dot(h1.astype(bf16), wi_ref[0],
                              preferred_element_type=f32) + bi_ref[0])
        ffn = jnp.dot(inter.astype(bf16), wf_ref[0], preferred_element_type=f32) + bf_ref[0]
        x_scr[...] = ln(ffn + h1, ln2g_ref[0], ln2b_ref[0])

        # ----- epilogue: pooler + packed task heads (+ fused cosine) on the last layer -----
        @pl.when(l == L - 1)
        def _():
            cls = x_scr[...].reshape(BT, S, H)[:, 0, :]          # (BT, H) CLS token
            pooled = jnp.tanh(jnp.dot(cls.astype(bf16), pw_ref[...],
                                      preferred_element_type=f32) + pb_ref[...])
            head = jnp.dot(pooled.astype(bf16), hw_ref[...],
                           preferred_element_type=f32) + hb_ref[...]     # (BT, 96)

            if compute_cosine:                                   # static (trace-time) flag
                a = pooled[:npairs, :]
                b = pooled[npairs:, :]
                dot = jnp.sum(a * b, axis=-1, keepdims=True)
                na = jnp.sqrt(jnp.sum(a * a, axis=-1, keepdims=True))
                nb = jnp.sqrt(jnp.sum(b * b, axis=-1, keepdims=True))
                # torch.nn.CosineSimilarity clamps each norm separately (eps=1e-8)
                cos = dot / (jnp.maximum(na, 1e-8) * jnp.maximum(nb, 1e-8))
                sim = jnp.maximum(cos, 0.0) * 5.0                # (npairs, 1)
                sim_full = jnp.concatenate(
                    [sim, jnp.zeros((BT - npairs, 1), f32)], axis=0)     # (BT, 1)
                col = jax.lax.broadcasted_iota(jnp.int32, (1, HEAD_PROJ_W), 1)
                head = head + sim_full * jnp.where(col == COS_COL, 1.0, 0.0)

            # single unmasked lane-dense 128-wide store: [heads(96) | pooled(32)]
            out_ref[...] = jnp.concatenate([head, pooled], axis=-1)

    return kernel


# ---------------- wrapper: one pallas_call for the whole forward ----------------
def fused_bert_forward(model, input_ids, attention_mask, *, compute_cosine=False, npairs=0):
    B, S0 = input_ids.shape
    # pad S to a sublane multiple so in-kernel (B,S,H)<->(B*S,H) reshapes are layout no-ops
    S = ((S0 + SUBLANE - 1) // SUBLANE) * SUBLANE
    if S != S0:
        input_ids = jnp.pad(input_ids, ((0, 0), (0, S - S0)))
        attention_mask = jnp.pad(attention_mask, ((0, 0), (0, S - S0)))

    # embeddings (gather) + additive mask built in plain-JAX glue; token_type always segment 0,
    # matching BertModel's default token_type_ids
    emb = (model["word_emb"][input_ids]
           + model["pos_emb"][:S][None, :, :]
           + model["tok_emb"][0][None, None, :]).astype(jnp.float32)              # (B, S, H)
    add_mask = ((1.0 - attention_mask.astype(jnp.float32)) * -10000.0)[:, None, :]  # (B, 1, S)

    BT = B           # one batch block at toy sizes
    nb = B // BT     # TODO(synk): use >1 batch blocks at real batch sizes to shard across v7x TCs
    L, H = NUM_LAYERS, HIDDEN

    def layer_spec(arr):      # per-layer weights: streamed along the layer grid axis
        nd = arr.ndim
        return pl.BlockSpec((1,) + arr.shape[1:],
                            lambda b, l, _nd=nd: (l,) + (0,) * (_nd - 1))

    def shared_spec(arr):     # layer-invariant weights: same block every iteration
        nd = arr.ndim
        return pl.BlockSpec(arr.shape, lambda b, l, _nd=nd: (0,) * _nd)

    weights = [model[k] for k in WEIGHT_ORDER]
    w_specs = [layer_spec(model[k]) if k in PER_LAYER else shared_spec(model[k])
               for k in WEIGHT_ORDER]

    kernel = make_fused_bert_kernel(BT, S, H, NUM_HEADS, L, compute_cosine, npairs)
    out = pl.pallas_call(
        kernel,
        out_shape=jax.ShapeDtypeStruct((B, OUT_W), jnp.float32),
        grid_spec=pltpu.PrefetchScalarGridSpec(
            num_scalar_prefetch=0,
            grid=(nb, L),
            in_specs=[pl.BlockSpec((BT, S, H), lambda b, l: (b, 0, 0)),
                      pl.BlockSpec((BT, 1, S), lambda b, l: (b, 0, 0))] + w_specs,
            out_specs=pl.BlockSpec((BT, OUT_W), lambda b, l: (b, 0)),
            scratch_shapes=[pltpu.VMEM((BT * S, H), jnp.float32)],   # persistent activations
        ),
        compiler_params=pltpu.CompilerParams(
            dimension_semantics=("parallel", "arbitrary"),
            vmem_limit_bytes=32 * 1024 * 1024),
    )(emb, add_mask, *weights)
    return out


# ---------------- parameter init (deterministic, synthetic) ----------------
def init_params(key):
    keys = iter(jax.random.split(key, 256))

    def nrm(shape):
        return 0.02 * jax.random.normal(next(keys), shape, dtype=jnp.float32)

    p = {
        "word_emb": nrm((VOCAB, HIDDEN)),
        "pos_emb": nrm((MAX_POS, HIDDEN)),
        "tok_emb": nrm((2, HIDDEN)),
        "emb_ln_g": jnp.ones((1, HIDDEN), jnp.float32),
        "emb_ln_b": jnp.zeros((1, HIDDEN), jnp.float32),
        "layers": [],
        "pool_w": nrm((HIDDEN, HIDDEN)),
        "pool_b": jnp.zeros((1, HIDDEN), jnp.float32),
        # task heads (from MultitaskBERT.__init__)
        "sent_w": nrm((HIDDEN, NUM_LABELS)),
        "sent_b": jnp.zeros((1, NUM_LABELS), jnp.float32),
        "para_w": nrm((HIDDEN, 1)),
        "para_b": jnp.zeros((1, 1), jnp.float32),
        "simi_w": nrm((HIDDEN, 1)),   # proj_simi exists in __init__ but is unused in forward
        "simi_b": jnp.zeros((1, 1), jnp.float32),
    }
    for _ in range(NUM_LAYERS):
        p["layers"].append({
            "wq": nrm((HIDDEN, HIDDEN)), "bq": jnp.zeros((1, HIDDEN), jnp.float32),
            "wk": nrm((HIDDEN, HIDDEN)), "bk": jnp.zeros((1, HIDDEN), jnp.float32),
            "wv": nrm((HIDDEN, HIDDEN)), "bv": jnp.zeros((1, HIDDEN), jnp.float32),
            "wo": nrm((HIDDEN, HIDDEN)), "bo": jnp.zeros((1, HIDDEN), jnp.float32),
            "ln1_g": jnp.ones((1, HIDDEN), jnp.float32),
            "ln1_b": jnp.zeros((1, HIDDEN), jnp.float32),
            "wi": nrm((HIDDEN, INTERMEDIATE)), "bi": jnp.zeros((1, INTERMEDIATE), jnp.float32),
            "wf": nrm((INTERMEDIATE, HIDDEN)), "bf": jnp.zeros((1, HIDDEN), jnp.float32),
            "ln2_g": jnp.ones((1, HIDDEN), jnp.float32),
            "ln2_b": jnp.zeros((1, HIDDEN), jnp.float32),
        })
    return p


def prepare_model(p):
    """Stack per-layer weights with a leading L axis, fuse q|k|v into one padded 128-wide
    projection, pre-cast matmul operands to bf16, and pack all task-head projections into
    one lane-dense (H, 96) matrix (output slab = heads(96) | pooled(32))."""
    bf16 = jnp.bfloat16
    L, H = NUM_LAYERS, HIDDEN

    def stk(name):
        return jnp.stack([lp[name] for lp in p["layers"]], axis=0)

    # fused QKV weight (L, H, 128): [ q | k | v | zero-pad ]
    wqkv = jnp.concatenate([stk("wq"), stk("wk"), stk("wv"),
                            jnp.zeros((L, H, QKV_W - 3 * H), jnp.float32)], axis=2)
    bqkv = jnp.concatenate([stk("bq"), stk("bk"), stk("bv"),
                            jnp.zeros((L, 1, QKV_W - 3 * H), jnp.float32)], axis=2)

    # packed task-head projection (H, 96): sent | para | simi_proj | zeros (cos col stays 0)
    head_w = jnp.zeros((H, HEAD_PROJ_W), jnp.float32)
    head_w = head_w.at[:, SENT_COL:SENT_COL + NUM_LABELS].set(p["sent_w"])
    head_w = head_w.at[:, PARA_COL:PARA_COL + 1].set(p["para_w"])
    head_w = head_w.at[:, SIMI_COL:SIMI_COL + 1].set(p["simi_w"])
    head_b = jnp.zeros((1, HEAD_PROJ_W), jnp.float32)
    head_b = head_b.at[:, SENT_COL:SENT_COL + NUM_LABELS].set(p["sent_b"])
    head_b = head_b.at[:, PARA_COL:PARA_COL + 1].set(p["para_b"])
    head_b = head_b.at[:, SIMI_COL:SIMI_COL + 1].set(p["simi_b"])

    return {
        "word_emb": p["word_emb"], "pos_emb": p["pos_emb"], "tok_emb": p["tok_emb"],
        "emb_ln_g": p["emb_ln_g"], "emb_ln_b": p["emb_ln_b"],
        "wqkv": wqkv.astype(bf16), "bqkv": bqkv,
        "wo": stk("wo").astype(bf16), "bo": stk("bo"),
        "ln1_g": stk("ln1_g"), "ln1_b": stk("ln1_b"),
        "wi": stk("wi").astype(bf16), "bi": stk("bi"),
        "wf": stk("wf").astype(bf16), "bf": stk("bf"),
        "ln2_g": stk("ln2_g"), "ln2_b": stk("ln2_b"),
        "pool_w": p["pool_w"].astype(bf16), "pool_b": p["pool_b"],
        "head_w": head_w.astype(bf16), "head_b": head_b,
    }


# ---------------- task heads (dropouts are identity in eval mode) ----------------
@jax.jit
def predict_sentiment(model, input_ids, attention_mask):
    out = fused_bert_forward(model, input_ids, attention_mask)
    return out[:, SENT_COL:SENT_COL + NUM_LABELS]                 # (B, 5)


def _pair_inputs(ids1, mask1, ids2, mask2):
    B = ids1.shape[0]
    sep = jnp.full((B, 1), SEP_TOKEN_ID, dtype=ids1.dtype)
    ones = jnp.ones((B, 1), dtype=mask1.dtype)
    ids = jnp.concatenate([ids1, sep, ids2, sep], axis=1)
    mask = jnp.concatenate([mask1, ones, mask2, ones], axis=1)
    return ids, mask


@jax.jit
def predict_paraphrase(model, ids1, mask1, ids2, mask2):
    ids, mask = _pair_inputs(ids1, mask1, ids2, mask2)
    out = fused_bert_forward(model, ids, mask)
    return out[:, PARA_COL:PARA_COL + 1]                          # (B, 1)


@jax.jit
def predict_similarity(model, ids1, mask1, ids2, mask2):
    # both sentence batches in ONE forward pass (stacked along batch -> 2B rows);
    # the cosine-ReLU*5 head is fused into the kernel epilogue (no second pallas_call).
    B = ids1.shape[0]
    ids = jnp.concatenate([ids1, ids2], axis=0)
    mask = jnp.concatenate([mask1, mask2], axis=0)
    out = fused_bert_forward(model, ids, mask, compute_cosine=True, npairs=B)
    return out[:B, COS_COL]                                       # (B,)


# ---------------- main ----------------
if __name__ == "__main__":
    key = jax.random.PRNGKey(0)
    pkey, dkey = jax.random.split(key)
    params = init_params(pkey)
    model = prepare_model(params)

    B, S = 2, 8
    k1, k2 = jax.random.split(dkey)
    ids1 = jax.random.randint(k1, (B, S), 0, VOCAB, dtype=jnp.int32)
    ids2 = jax.random.randint(k2, (B, S), 0, VOCAB, dtype=jnp.int32)
    mask1 = jnp.array([[1] * S, [1] * (S - 2) + [0] * 2], dtype=jnp.int32)
    mask2 = jnp.ones((B, S), dtype=jnp.int32)

    sent_logits = predict_sentiment(model, ids1, mask1)                  # (B, 5)
    para_logit = predict_paraphrase(model, ids1, mask1, ids2, mask2)     # (B, 1)
    simi_logit = predict_similarity(model, ids1, mask1, ids2, mask2)     # (B,)

    jax.block_until_ready((sent_logits, para_logit, simi_logit))
    assert sent_logits.shape == (B, NUM_LABELS)
    assert para_logit.shape == (B, 1)
    assert simi_logit.shape == (B,)
    assert bool(jnp.all(jnp.isfinite(sent_logits)))
    assert bool(jnp.all(jnp.isfinite(para_logit)))
    assert bool(jnp.all(jnp.isfinite(simi_logit)))
    print("KERNEL_OK")
</pallas_src>

<mosaic_0001>
module attributes {stable_mosaic.version = 11 : i64} {
  func.func @kernel(%arg0: i32, %arg1: i32, %arg2: memref<2x8x32xf32, #tpu.memory_space<vmem>>, %arg3: memref<2x1x8xf32, #tpu.memory_space<vmem>>, %arg4: memref<1x32xf32, #tpu.memory_space<vmem>>, %arg5: memref<1x32xf32, #tpu.memory_space<vmem>>, %arg6: memref<1x32x128xbf16, #tpu.memory_space<vmem>>, %arg7: memref<1x1x128xf32, #tpu.memory_space<vmem>>, %arg8: memref<1x32x32xbf16, #tpu.memory_space<vmem>>, %arg9: memref<1x1x32xf32, #tpu.memory_space<vmem>>, %arg10: memref<1x1x32xf32, #tpu.memory_space<vmem>>, %arg11: memref<1x1x32xf32, #tpu.memory_space<vmem>>, %arg12: memref<1x32x64xbf16, #tpu.memory_space<vmem>>, %arg13: memref<1x1x64xf32, #tpu.memory_space<vmem>>, %arg14: memref<1x64x32xbf16, #tpu.memory_space<vmem>>, %arg15: memref<1x1x32xf32, #tpu.memory_space<vmem>>, %arg16: memref<1x1x32xf32, #tpu.memory_space<vmem>>, %arg17: memref<1x1x32xf32, #tpu.memory_space<vmem>>, %arg18: memref<32x32xbf16, #tpu.memory_space<vmem>>, %arg19: memref<1x32xf32, #tpu.memory_space<vmem>>, %arg20: memref<32x96xbf16, #tpu.memory_space<vmem>>, %arg21: memref<1x96xf32, #tpu.memory_space<vmem>>, %arg22: memref<2x128xf32, #tpu.memory_space<vmem>>, %arg23: memref<16x32xf32, #tpu.memory_space<vmem>>) attributes {dimension_semantics = [#tpu.dimension_semantics<parallel>, #tpu.dimension_semantics<arbitrary>], iteration_bounds = array<i64: 1, 2>, scalar_prefetch = 0 : i64, scratch_operands = 1 : i64, tpu.core_type = #tpu.core_type<tc>, window_params = [{transform_indices = @transform_0, window_bounds = array<i64: 2, 8, 32>}, {transform_indices = @transform_1, window_bounds = array<i64: 2, 1, 8>}, {pipeline_mode = #tpu.pipeline_mode<synchronous>, transform_indices = @transform_2, window_bounds = array<i64: 1, 32>}, {pipeline_mode = #tpu.pipeline_mode<synchronous>, transform_indices = @transform_3, window_bounds = array<i64: 1, 32>}, {transform_indices = @transform_4, window_bounds = array<i64: 1, 32, 128>}, {transform_indices = @transform_5, window_bounds = array<i64: 1, 1, 128>}, {transform_indices = @transform_6, window_bounds = array<i64: 1, 32, 32>}, {transform_indices = @transform_7, window_bounds = array<i64: 1, 1, 32>}, {transform_indices = @transform_8, window_bounds = array<i64: 1, 1, 32>}, {transform_indices = @transform_9, window_bounds = array<i64: 1, 1, 32>}, {transform_indices = @transform_10, window_bounds = array<i64: 1, 32, 64>}, {transform_indices = @transform_11, window_bounds = array<i64: 1, 1, 64>}, {transform_indices = @transform_12, window_bounds = array<i64: 1, 64, 32>}, {transform_indices = @transform_13, window_bounds = array<i64: 1, 1, 32>}, {transform_indices = @transform_14, window_bounds = array<i64: 1, 1, 32>}, {transform_indices = @transform_15, window_bounds = array<i64: 1, 1, 32>}, {pipeline_mode = #tpu.pipeline_mode<synchronous>, transform_indices = @transform_16, window_bounds = array<i64: 32, 32>}, {pipeline_mode = #tpu.pipeline_mode<synchronous>, transform_indices = @transform_17, window_bounds = array<i64: 1, 32>}, {pipeline_mode = #tpu.pipeline_mode<synchronous>, transform_indices = @transform_18, window_bounds = array<i64: 32, 96>}, {pipeline_mode = #tpu.pipeline_mode<synchronous>, transform_indices = @transform_19, window_bounds = array<i64: 1, 96>}, {transform_indices = @transform_20, window_bounds = array<i64: 2, 128>}]} {
    %c0_i32 = arith.constant 0 : i32
    %0 = arith.cmpi eq, %arg1, %c0_i32 : i32
    %1 = arith.extui %0 : i1 to i32
    %c0_i32_0 = arith.constant 0 : i32
    %2 = arith.cmpi ne, %1, %c0_i32_0 : i32
    scf.if %2 {
      %c0_72 = arith.constant 0 : index
      %c0_73 = arith.constant 0 : index
      %c0_74 = arith.constant 0 : index
      %167 = vector.load %arg2[%c0_72, %c0_73, %c0_74] : memref<2x8x32xf32, #tpu.memory_space<vmem>>, vector<2x8x32xf32>
      %168 = vector.shape_cast %167 : vector<2x8x32xf32> to vector<16x32xf32>
      %c0_75 = arith.constant 0 : index
      %c0_76 = arith.constant 0 : index
      %169 = vector.load %arg4[%c0_75, %c0_76] : memref<1x32xf32, #tpu.memory_space<vmem>>, vector<1x32xf32>
      %c0_77 = arith.constant 0 : index
      %c0_78 = arith.constant 0 : index
      %170 = vector.load %arg5[%c0_77, %c0_78] : memref<1x32xf32, #tpu.memory_space<vmem>>, vector<1x32xf32>
      %cst_79 = arith.constant dense<0.000000e+00> : vector<16xf32>
      %171 = vector.multi_reduction <add>, %168, %cst_79 [1] : vector<16x32xf32> to vector<16xf32>
      %172 = vector.shape_cast %171 : vector<16xf32> to vector<16x1xf32>
      %173 = arith.mulf %168, %168 : vector<16x32xf32>
      %cst_80 = arith.constant dense<0.000000e+00> : vector<16xf32>
      %174 = vector.multi_reduction <add>, %173, %cst_80 [1] : vector<16x32xf32> to vector<16xf32>
      %175 = vector.shape_cast %174 : vector<16xf32> to vector<16x1xf32>
      %cst_81 = arith.constant 3.125000e-02 : f32
      %176 = vector.broadcast %cst_81 : f32 to vector<16x1xf32>
      %177 = arith.mulf %172, %176 : vector<16x1xf32>
      %cst_82 = arith.constant 3.125000e-02 : f32
      %178 = vector.broadcast %cst_82 : f32 to vector<16x1xf32>
      %179 = arith.mulf %175, %178 : vector<16x1xf32>
      %180 = arith.mulf %177, %177 : vector<16x1xf32>
      %181 = arith.subf %179, %180 : vector<16x1xf32>
      %182 = vector.broadcast %177 : vector<16x1xf32> to vector<16x32xf32>
      %183 = arith.subf %168, %182 : vector<16x32xf32>
      %cst_83 = arith.constant 9.99999996E-13 : f32
      %184 = vector.broadcast %cst_83 : f32 to vector<16x1xf32>
      %185 = arith.addf %181, %184 : vector<16x1xf32>
      %186 = math.rsqrt %185 : vector<16x1xf32>
      %187 = vector.broadcast %186 : vector<16x1xf32> to vector<16x32xf32>
      %188 = arith.mulf %183, %187 : vector<16x32xf32>
      %189 = vector.broadcast %169 : vector<1x32xf32> to vector<16x32xf32>
      %190 = arith.mulf %188, %189 : vector<16x32xf32>
      %191 = vector.broadcast %170 : vector<1x32xf32> to vector<16x32xf32>
      %192 = arith.addf %190, %191 : vector<16x32xf32>
      %c0_84 = arith.constant 0 : index
      %c0_85 = arith.constant 0 : index
      %193 = vector.load %arg23[%c0_84, %c0_85] : memref<16x32xf32, #tpu.memory_space<vmem>>, vector<16x32xf32>
      tpu.vector_store %arg23[%c0_84, %c0_85], %192 {strides = array<i32>} : memref<16x32xf32, #tpu.memory_space<vmem>>, vector<16x32xf32>,
    } else {
    }
    %c0 = arith.constant 0 : index
    %c0_1 = arith.constant 0 : index
    %3 = vector.load %arg23[%c0, %c0_1] : memref<16x32xf32, #tpu.memory_space<vmem>>, vector<16x32xf32>
    %4 = arith.truncf %3 : vector<16x32xf32> to vector<16x32xbf16>
    %c0_2 = arith.constant 0 : index
    %c0_3 = arith.constant 0 : index
    %c0_4 = arith.constant 0 : index
    %5 = vector.load %arg6[%c0_2, %c0_3, %c0_4] : memref<1x32x128xbf16, #tpu.memory_space<vmem>>, vector<1x32x128xbf16>
    %6 = vector.shape_cast %5 : vector<1x32x128xbf16> to vector<32x128xbf16>
    %cst = arith.constant dense<0.000000e+00> : vector<16x128xf32>
    %7 = tpu.matmul %4, %6, %cst {dimension_numbers = #tpu.dot_dimension_numbers<[1], [0], [0], [1], [0, 0, 1, 1], [], []>} : vector<16x32xbf16>, vector<32x128xbf16>, vector<16x128xf32> -> vector<16x128xf32>
    %c0_5 = arith.constant 0 : index
    %c0_6 = arith.constant 0 : index
    %c0_7 = arith.constant 0 : index
    %8 = vector.load %arg7[%c0_5, %c0_6, %c0_7] : memref<1x1x128xf32, #tpu.memory_space<vmem>>, vector<1x1x128xf32>
    %9 = vector.shape_cast %8 : vector<1x1x128xf32> to vector<1x128xf32>
    %10 = vector.broadcast %9 : vector<1x128xf32> to vector<16x128xf32>
    %11 = arith.addf %7, %10 : vector<16x128xf32>
    %12 = vector.extract_strided_slice %11 {offsets = [0, 0], sizes = [16, 32], strides = [1, 1]} : vector<16x128xf32> to vector<16x32xf32>
    %cst_8 = arith.constant 2.500000e-01 : f32
    %13 = vector.broadcast %cst_8 : f32 to vector<16x32xf32>
    %14 = arith.mulf %12, %13 : vector<16x32xf32>
    %15 = vector.extract_strided_slice %11 {offsets = [0, 32], sizes = [16, 32], strides = [1, 1]} : vector<16x128xf32> to vector<16x32xf32>
    %16 = vector.extract_strided_slice %11 {offsets = [0, 64], sizes = [16, 32], strides = [1, 1]} : vector<16x128xf32> to vector<16x32xf32>
    %17 = vector.shape_cast %14 : vector<16x32xf32> to vector<2x8x32xf32>
    %18 = vector.shape_cast %15 : vector<16x32xf32> to vector<2x8x32xf32>
    %19 = vector.shape_cast %16 : vector<16x32xf32> to vector<2x8x32xf32>
    %c0_9 = arith.constant 0 : index
    %c0_10 = arith.constant 0 : index
    %c0_11 = arith.constant 0 : index
    %20 = vector.load %arg3[%c0_9, %c0_10, %c0_11] : memref<2x1x8xf32, #tpu.memory_space<vmem>>, vector<2x1x8xf32>
    %c0_12 = arith.constant 0 : index
    %c0_13 = arith.constant 0 : index
    %c0_14 = arith.constant 0 : index
    %21 = vector.load %arg8[%c0_12, %c0_13, %c0_14] : memref<1x32x32xbf16, #tpu.memory_space<vmem>>, vector<1x32x32xbf16>
    %22 = vector.shape_cast %21 : vector<1x32x32xbf16> to vector<32x32xbf16>
    %cst_15 = arith.constant 0.000000e+00 : f32
    %23 = vector.broadcast %cst_15 : f32 to vector<16x32xf32>
    %24 = vector.extract_strided_slice %17 {offsets = [0, 0, 0], sizes = [2, 8, 16], strides = [1, 1, 1]} : vector<2x8x32xf32> to vector<2x8x16xf32>
    %25 = arith.truncf %24 : vector<2x8x16xf32> to vector<2x8x16xbf16>
    %26 = vector.extract_strided_slice %18 {offsets = [0, 0, 0], sizes = [2, 8, 16], strides = [1, 1, 1]} : vector<2x8x32xf32> to vector<2x8x16xf32>
    %27 = arith.truncf %26 : vector<2x8x16xf32> to vector<2x8x16xbf16>
    "tpu.trace_start"() <{level = 10 : i32, message = "bqd,bkd->bqk"}> : () -> ()
    %cst_16 = arith.constant dense<0.000000e+00> : vector<2x8x8xf32>
    %28 = tpu.matmul %25, %27, %cst_16 {dimension_numbers = #tpu.dot_dimension_numbers<[2], [2], [1], [1], [0, 0, 0, 1, 1, 1], [0], [0]>} : vector<2x8x16xbf16>, vector<2x8x16xbf16>, vector<2x8x8xf32> -> vector<2x8x8xf32>
    "tpu.trace_stop"() : () -> ()
    %29 = vector.broadcast %20 : vector<2x1x8xf32> to vector<2x8x8xf32>
    %30 = arith.addf %28, %29 : vector<2x8x8xf32>
    %cst_17 = arith.constant dense<0xFF800000> : vector<2x8xf32>
    %31 = vector.multi_reduction <maximumf>, %30, %cst_17 [2] : vector<2x8x8xf32> to vector<2x8xf32>
    %32 = vector.shape_cast %31 : vector<2x8xf32> to vector<2x8x1xf32>
    %33 = vector.broadcast %32 : vector<2x8x1xf32> to vector<2x8x8xf32>
    %34 = arith.subf %30, %33 : vector<2x8x8xf32>
    %35 = math.exp %34 : vector<2x8x8xf32>
    %cst_18 = arith.constant dense<0.000000e+00> : vector<2x8xf32>
    %36 = vector.multi_reduction <add>, %35, %cst_18 [2] : vector<2x8x8xf32> to vector<2x8xf32>
    %37 = vector.shape_cast %36 : vector<2x8xf32> to vector<2x8x1xf32>
    %38 = tpu.reciprocal %37 {approx = true} : vector<2x8x1xf32> -> vector<2x8x1xf32>
    %39 = vector.broadcast %38 : vector<2x8x1xf32> to vector<2x8x8xf32>
    %40 = arith.mulf %35, %39 : vector<2x8x8xf32>
    %41 = arith.truncf %40 : vector<2x8x8xf32> to vector<2x8x8xbf16>
    %42 = vector.extract_strided_slice %19 {offsets = [0, 0, 0], sizes = [2, 8, 16], strides = [1, 1, 1]} : vector<2x8x32xf32> to vector<2x8x16xf32>
    %43 = arith.truncf %42 : vector<2x8x16xf32> to vector<2x8x16xbf16>
    "tpu.trace_start"() <{level = 10 : i32, message = "bqk,bkd->bqd"}> : () -> ()
    %cst_19 = arith.constant dense<0.000000e+00> : vector<2x8x16xf32>
    %44 = tpu.matmul %41, %43, %cst_19 {dimension_numbers = #tpu.dot_dimension_numbers<[2], [1], [1], [2], [0, 0, 0, 1, 1, 2], [0], [0]>} : vector<2x8x8xbf16>, vector<2x8x16xbf16>, vector<2x8x16xf32> -> vector<2x8x16xf32>
    "tpu.trace_stop"() : () -> ()
    %45 = vector.shape_cast %44 : vector<2x8x16xf32> to vector<16x16xf32>
    %46 = arith.truncf %45 : vector<16x16xf32> to vector<16x16xbf16>
    %47 = vector.extract_strided_slice %22 {offsets = [0, 0], sizes = [16, 32], strides = [1, 1]} : vector<32x32xbf16> to vector<16x32xbf16>
    %cst_20 = arith.constant dense<0.000000e+00> : vector<16x32xf32>
    %48 = tpu.matmul %46, %47, %cst_20 {dimension_numbers = #tpu.dot_dimension_numbers<[1], [0], [0], [1], [0, 0, 1, 1], [], []>} : vector<16x16xbf16>, vector<16x32xbf16>, vector<16x32xf32> -> vector<16x32xf32>
    %49 = arith.addf %23, %48 : vector<16x32xf32>
    %50 = vector.extract_strided_slice %17 {offsets = [0, 0, 16], sizes = [2, 8, 16], strides = [1, 1, 1]} : vector<2x8x32xf32> to vector<2x8x16xf32>
    %51 = arith.truncf %50 : vector<2x8x16xf32> to vector<2x8x16xbf16>
    %52 = vector.extract_strided_slice %18 {offsets = [0, 0, 16], sizes = [2, 8, 16], strides = [1, 1, 1]} : vector<2x8x32xf32> to vector<2x8x16xf32>
    %53 = arith.truncf %52 : vector<2x8x16xf32> to vector<2x8x16xbf16>
    "tpu.trace_start"() <{level = 10 : i32, message = "bqd,bkd->bqk"}> : () -> ()
    %cst_21 = arith.constant dense<0.000000e+00> : vector<2x8x8xf32>
    %54 = tpu.matmul %51, %53, %cst_21 {dimension_numbers = #tpu.dot_dimension_numbers<[2], [2], [1], [1], [0, 0, 0, 1, 1, 1], [0], [0]>} : vector<2x8x16xbf16>, vector<2x8x16xbf16>, vector<2x8x8xf32> -> vector<2x8x8xf32>
    "tpu.trace_stop"() : () -> ()
    %55 = vector.broadcast %20 : vector<2x1x8xf32> to vector<2x8x8xf32>
    %56 = arith.addf %54, %55 : vector<2x8x8xf32>
    %cst_22 = arith.constant dense<0xFF800000> : vector<2x8xf32>
    %57 = vector.multi_reduction <maximumf>, %56, %cst_22 [2] : vector<2x8x8xf32> to vector<2x8xf32>
    %58 = vector.shape_cast %57 : vector<2x8xf32> to vector<2x8x1xf32>
    %59 = vector.broadcast %58 : vector<2x8x1xf32> to vector<2x8x8xf32>
    %60 = arith.subf %56, %59 : vector<2x8x8xf32>
    %61 = math.exp %60 : vector<2x8x8xf32>
    %cst_23 = arith.constant dense<0.000000e+00> : vector<2x8xf32>
    %62 = vector.multi_reduction <add>, %61, %cst_23 [2] : vector<2x8x8xf32> to vector<2x8xf32>
    %63 = vector.shape_cast %62 : vector<2x8xf32> to vector<2x8x1xf32>
    %64 = tpu.reciprocal %63 {approx = true} : vector<2x8x1xf32> -> vector<2x8x1xf32>
    %65 = vector.broadcast %64 : vector<2x8x1xf32> to vector<2x8x8xf32>
    %66 = arith.mulf %61, %65 : vector<2x8x8xf32>
    %67 = arith.truncf %66 : vector<2x8x8xf32> to vector<2x8x8xbf16>
    %68 = vector.extract_strided_slice %19 {offsets = [0, 0, 16], sizes = [2, 8, 16], strides = [1, 1, 1]} : vector<2x8x32xf32> to vector<2x8x16xf32>
    %69 = arith.truncf %68 : vector<2x8x16xf32> to vector<2x8x16xbf16>
    "tpu.trace_start"() <{level = 10 : i32, message = "bqk,bkd->bqd"}> : () -> ()
    %cst_24 = arith.constant dense<0.000000e+00> : vector<2x8x16xf32>
    %70 = tpu.matmul %67, %69, %cst_24 {dimension_numbers = #tpu.dot_dimension_numbers<[2], [1], [1], [2], [0, 0, 0, 1, 1, 2], [0], [0]>} : vector<2x8x8xbf16>, vector<2x8x16xbf16>, vector<2x8x16xf32> -> vector<2x8x16xf32>
    "tpu.trace_stop"() : () -> ()
    %71 = vector.shape_cast %70 : vector<2x8x16xf32> to vector<16x16xf32>
    %72 = arith.truncf %71 : vector<16x16xf32> to vector<16x16xbf16>
    %73 = vector.extract_strided_slice %22 {offsets = [16, 0], sizes = [16, 32], strides = [1, 1]} : vector<32x32xbf16> to vector<16x32xbf16>
    %cst_25 = arith.constant dense<0.000000e+00> : vector<16x32xf32>
    %74 = tpu.matmul %72, %73, %cst_25 {dimension_numbers = #tpu.dot_dimension_numbers<[1], [0], [0], [1], [0, 0, 1, 1], [], []>} : vector<16x16xbf16>, vector<16x32xbf16>, vector<16x32xf32> -> vector<16x32xf32>
    %75 = arith.addf %49, %74 : vector<16x32xf32>
    %c0_26 = arith.constant 0 : index
    %c0_27 = arith.constant 0 : index
    %c0_28 = arith.constant 0 : index
    %76 = vector.load %arg9[%c0_26, %c0_27, %c0_28] : memref<1x1x32xf32, #tpu.memory_space<vmem>>, vector<1x1x32xf32>
    %77 = vector.shape_cast %76 : vector<1x1x32xf32> to vector<1x32xf32>
    %78 = vector.broadcast %77 : vector<1x32xf32> to vector<16x32xf32>
    %79 = arith.addf %75, %78 : vector<16x32xf32>
    %80 = arith.addf %79, %3 : vector<16x32xf32>
    %c0_29 = arith.constant 0 : index
    %c0_30 = arith.constant 0 : index
    %c0_31 = arith.constant 0 : index
    %81 = vector.load %arg10[%c0_29, %c0_30, %c0_31] : memref<1x1x32xf32, #tpu.memory_space<vmem>>, vector<1x1x32xf32>
    %82 = vector.shape_cast %81 : vector<1x1x32xf32> to vector<1x32xf32>
    %c0_32 = arith.constant 0 : index
    %c0_33 = arith.constant 0 : index
    %c0_34 = arith.constant 0 : index
    %83 = vector.load %arg11[%c0_32, %c0_33, %c0_34] : memref<1x1x32xf32, #tpu.memory_space<vmem>>, vector<1x1x32xf32>
    %84 = vector.shape_cast %83 : vector<1x1x32xf32> to vector<1x32xf32>
    %cst_35 = arith.constant dense<0.000000e+00> : vector<16xf32>
    %85 = vector.multi_reduction <add>, %80, %cst_35 [1] : vector<16x32xf32> to vector<16xf32>
    %86 = vector.shape_cast %85 : vector<16xf32> to vector<16x1xf32>
    %87 = arith.mulf %80, %80 : vector<16x32xf32>
    %cst_36 = arith.constant dense<0.000000e+00> : vector<16xf32>
    %88 = vector.multi_reduction <add>, %87, %cst_36 [1] : vector<16x32xf32> to vector<16xf32>
    %89 = vector.shape_cast %88 : vector<16xf32> to vector<16x1xf32>
    %cst_37 = arith.constant 3.125000e-02 : f32
    %90 = vector.broadcast %cst_37 : f32 to vector<16x1xf32>
    %91 = arith.mulf %86, %90 : vector<16x1xf32>
    %cst_38 = arith.constant 3.125000e-02 : f32
    %92 = vector.broadcast %cst_38 : f32 to vector<16x1xf32>
    %93 = arith.mulf %89, %92 : vector<16x1xf32>
    %94 = arith.mulf %91, %91 : vector<16x1xf32>
    %95 = arith.subf %93, %94 : vector<16x1xf32>
    %96 = vector.broadcast %91 : vector<16x1xf32> to vector<16x32xf32>
    %97 = arith.subf %80, %96 : vector<16x32xf32>
    %cst_39 = arith.constant 9.99999996E-13 : f32
    %98 = vector.broadcast %cst_39 : f32 to vector<16x1xf32>
    %99 = arith.addf %95, %98 : vector<16x1xf32>
    %100 = math.rsqrt %99 : vector<16x1xf32>
    %101 = vector.broadcast %100 : vector<16x1xf32> to vector<16x32xf32>
    %102 = arith.mulf %97, %101 : vector<16x32xf32>
    %103 = vector.broadcast %82 : vector<1x32xf32> to vector<16x32xf32>
    %104 = arith.mulf %102, %103 : vector<16x32xf32>
    %105 = vector.broadcast %84 : vector<1x32xf32> to vector<16x32xf32>
    %106 = arith.addf %104, %105 : vector<16x32xf32>
    %107 = arith.truncf %106 : vector<16x32xf32> to vector<16x32xbf16>
    %c0_40 = arith.constant 0 : index
    %c0_41 = arith.constant 0 : index
    %c0_42 = arith.constant 0 : index
    %108 = vector.load %arg12[%c0_40, %c0_41, %c0_42] : memref<1x32x64xbf16, #tpu.memory_space<vmem>>, vector<1x32x64xbf16>
    %109 = vector.shape_cast %108 : vector<1x32x64xbf16> to vector<32x64xbf16>
    %cst_43 = arith.constant dense<0.000000e+00> : vector<16x64xf32>
    %110 = tpu.matmul %107, %109, %cst_43 {dimension_numbers = #tpu.dot_dimension_numbers<[1], [0], [0], [1], [0, 0, 1, 1], [], []>} : vector<16x32xbf16>, vector<32x64xbf16>, vector<16x64xf32> -> vector<16x64xf32>
    %c0_44 = arith.constant 0 : index
    %c0_45 = arith.constant 0 : index
    %c0_46 = arith.constant 0 : index
    %111 = vector.load %arg13[%c0_44, %c0_45, %c0_46] : memref<1x1x64xf32, #tpu.memory_space<vmem>>, vector<1x1x64xf32>
    %112 = vector.shape_cast %111 : vector<1x1x64xf32> to vector<1x64xf32>
    %113 = vector.broadcast %112 : vector<1x64xf32> to vector<16x64xf32>
    %114 = arith.addf %110, %113 : vector<16x64xf32>
    %cst_47 = arith.constant 5.000000e-01 : f32
    %115 = vector.broadcast %cst_47 : f32 to vector<16x64xf32>
    %116 = arith.mulf %115, %114 : vector<16x64xf32>
    %cst_48 = arith.constant 4.471500e-02 : f32
    %117 = vector.broadcast %cst_48 : f32 to vector<16x64xf32>
    %118 = arith.mulf %117, %114 : vector<16x64xf32>
    %119 = arith.mulf %118, %114 : vector<16x64xf32>
    %120 = arith.mulf %119, %114 : vector<16x64xf32>
    %121 = arith.addf %114, %120 : vector<16x64xf32>
    %cst_49 = arith.constant 0.797884583 : f32
    %122 = vector.broadcast %cst_49 : f32 to vector<16x64xf32>
    %123 = arith.mulf %122, %121 : vector<16x64xf32>
    %124 = math.tanh %123 : vector<16x64xf32>
    %cst_50 = arith.constant 1.000000e+00 : f32
    %125 = vector.broadcast %cst_50 : f32 to vector<16x64xf32>
    %126 = arith.addf %125, %124 : vector<16x64xf32>
    %127 = arith.mulf %116, %126 : vector<16x64xf32>
    %128 = arith.truncf %127 : vector<16x64xf32> to vector<16x64xbf16>
    %c0_51 = arith.constant 0 : index
    %c0_52 = arith.constant 0 : index
    %c0_53 = arith.constant 0 : index
    %129 = vector.load %arg14[%c0_51, %c0_52, %c0_53] : memref<1x64x32xbf16, #tpu.memory_space<vmem>>, vector<1x64x32xbf16>
    %130 = vector.shape_cast %129 : vector<1x64x32xbf16> to vector<64x32xbf16>
    %cst_54 = arith.constant dense<0.000000e+00> : vector<16x32xf32>
    %131 = tpu.matmul %128, %130, %cst_54 {dimension_numbers = #tpu.dot_dimension_numbers<[1], [0], [0], [1], [0, 0, 1, 1], [], []>} : vector<16x64xbf16>, vector<64x32xbf16>, vector<16x32xf32> -> vector<16x32xf32>
    %c0_55 = arith.constant 0 : index
    %c0_56 = arith.constant 0 : index
    %c0_57 = arith.constant 0 : index
    %132 = vector.load %arg15[%c0_55, %c0_56, %c0_57] : memref<1x1x32xf32, #tpu.memory_space<vmem>>, vector<1x1x32xf32>
    %133 = vector.shape_cast %132 : vector<1x1x32xf32> to vector<1x32xf32>
    %134 = vector.broadcast %133 : vector<1x32xf32> to vector<16x32xf32>
    %135 = arith.addf %131, %134 : vector<16x32xf32>
    %136 = arith.addf %135, %106 : vector<16x32xf32>
    %c0_58 = arith.constant 0 : index
    %c0_59 = arith.constant 0 : index
    %c0_60 = arith.constant 0 : index
    %137 = vector.load %arg16[%c0_58, %c0_59, %c0_60] : memref<1x1x32xf32, #tpu.memory_space<vmem>>, vector<1x1x32xf32>
    %138 = vector.shape_cast %137 : vector<1x1x32xf32> to vector<1x32xf32>
    %c0_61 = arith.constant 0 : index
    %c0_62 = arith.constant 0 : index
    %c0_63 = arith.constant 0 : index
    %139 = vector.load %arg17[%c0_61, %c0_62, %c0_63] : memref<1x1x32xf32, #tpu.memory_space<vmem>>, vector<1x1x32xf32>
    %140 = vector.shape_cast %139 : vector<1x1x32xf32> to vector<1x32xf32>
    %cst_64 = arith.constant dense<0.000000e+00> : vector<16xf32>
    %141 = vector.multi_reduction <add>, %136, %cst_64 [1] : vector<16x32xf32> to vector<16xf32>
    %142 = vector.shape_cast %141 : vector<16xf32> to vector<16x1xf32>
    %143 = arith.mulf %136, %136 : vector<16x32xf32>
    %cst_65 = arith.constant dense<0.000000e+00> : vector<16xf32>
    %144 = vector.multi_reduction <add>, %143, %cst_65 [1] : vector<16x32xf32> to vector<16xf32>
    %145 = vector.shape_cast %144 : vector<16xf32> to vector<16x1xf32>
    %cst_66 = arith.constant 3.125000e-02 : f32
    %146 = vector.broadcast %cst_66 : f32 to vector<16x1xf32>
    %147 = arith.mulf %142, %146 : vector<16x1xf32>
    %cst_67 = arith.constant 3.125000e-02 : f32
    %148 = vector.broadcast %cst_67 : f32 to vector<16x1xf32>
    %149 = arith.mulf %145, %148 : vector<16x1xf32>
    %150 = arith.mulf %147, %147 : vector<16x1xf32>
    %151 = arith.subf %149, %150 : vector<16x1xf32>
    %152 = vector.broadcast %147 : vector<16x1xf32> to vector<16x32xf32>
    %153 = arith.subf %136, %152 : vector<16x32xf32>
    %cst_68 = arith.constant 9.99999996E-13 : f32
    %154 = vector.broadcast %cst_68 : f32 to vector<16x1xf32>
    %155 = arith.addf %151, %154 : vector<16x1xf32>
    %156 = math.rsqrt %155 : vector<16x1xf32>
    %157 = vector.broadcast %156 : vector<16x1xf32> to vector<16x32xf32>
    %158 = arith.mulf %153, %157 : vector<16x32xf32>
    %159 = vector.broadcast %138 : vector<1x32xf32> to vector<16x32xf32>
    %160 = arith.mulf %158, %159 : vector<16x32xf32>
    %161 = vector.broadcast %140 : vector<1x32xf32> to vector<16x32xf32>
    %162 = arith.addf %160, %161 : vector<16x32xf32>
    %c0_69 = arith.constant 0 : index
    %c0_70 = arith.constant 0 : index
    %163 = vector.load %arg23[%c0_69, %c0_70] : memref<16x32xf32, #tpu.memory_space<vmem>>, vector<16x32xf32>
    tpu.vector_store %arg23[%c0_69, %c0_70], %162 {strides = array<i32>} : memref<16x32xf32, #tpu.memory_space<vmem>>, vector<16x32xf32>,
    %c1_i32 = arith.constant 1 : i32
    %164 = arith.cmpi eq, %arg1, %c1_i32 : i32
    %165 = arith.extui %164 : i1 to i32
    %c0_i32_71 = arith.constant 0 : i32
    %166 = arith.cmpi ne, %165, %c0_i32_71 : i32
    scf.if %166 {
      %c0_72 = arith.constant 0 : index
      %c0_73 = arith.constant 0 : index
      %167 = vector.load %arg23[%c0_72, %c0_73] : memref<16x32xf32, #tpu.memory_space<vmem>>, vector<16x32xf32>
      %168 = vector.shape_cast %167 : vector<16x32xf32> to vector<2x8x32xf32>
      %169 = vector.extract_strided_slice %168 {offsets = [0, 0, 0], sizes = [2, 1, 32], strides = [1, 1, 1]} : vector<2x8x32xf32> to vector<2x1x32xf32>
      %170 = vector.shape_cast %169 : vector<2x1x32xf32> to vector<2x32xf32>
      %171 = arith.truncf %170 : vector<2x32xf32> to vector<2x32xbf16>
      %c0_74 = arith.constant 0 : index
      %c0_75 = arith.constant 0 : index
      %172 = vector.load %arg18[%c0_74, %c0_75] : memref<32x32xbf16, #tpu.memory_space<vmem>>, vector<32x32xbf16>
      %cst_76 = arith.constant dense<0.000000e+00> : vector<2x32xf32>
      %173 = tpu.matmul %171, %172, %cst_76 {dimension_numbers = #tpu.dot_dimension_numbers<[1], [0], [0], [1], [0, 0, 1, 1], [], []>} : vector<2x32xbf16>, vector<32x32xbf16>, vector<2x32xf32> -> vector<2x32xf32>
      %c0_77 = arith.constant 0 : index
      %c0_78 = arith.constant 0 : index
      %174 = vector.load %arg19[%c0_77, %c0_78] : memref<1x32xf32, #tpu.memory_space<vmem>>, vector<1x32xf32>
      %175 = vector.broadcast %174 : vector<1x32xf32> to vector<2x32xf32>
      %176 = arith.addf %173, %175 : vector<2x32xf32>
      %177 = math.tanh %176 : vector<2x32xf32>
      %178 = arith.truncf %177 : vector<2x32xf32> to vector<2x32xbf16>
      %c0_79 = arith.constant 0 : index
      %c0_80 = arith.constant 0 : index
      %179 = vector.load %arg20[%c0_79, %c0_80] : memref<32x96xbf16, #tpu.memory_space<vmem>>, vector<32x96xbf16>
      %cst_81 = arith.constant dense<0.000000e+00> : vector<2x96xf32>
      %180 = tpu.matmul %178, %179, %cst_81 {dimension_numbers = #tpu.dot_dimension_numbers<[1], [0], [0], [1], [0, 0, 1, 1], [], []>} : vector<2x32xbf16>, vector<32x96xbf16>, vector<2x96xf32> -> vector<2x96xf32>
      %c0_82 = arith.constant 0 : index
      %c0_83 = arith.constant 0 : index
      %181 = vector.load %arg21[%c0_82, %c0_83] : memref<1x96xf32, #tpu.memory_space<vmem>>, vector<1x96xf32>
      %182 = vector.broadcast %181 : vector<1x96xf32> to vector<2x96xf32>
      %183 = arith.addf %180, %182 : vector<2x96xf32>
      %184 = tpu.concatenate %183, %177 in 1 : vector<2x96xf32>, vector<2x32xf32> -> vector<2x128xf32>
      %c0_84 = arith.constant 0 : index
      %c0_85 = arith.constant 0 : index
      %185 = vector.load %arg22[%c0_84, %c0_85] : memref<2x128xf32, #tpu.memory_space<vmem>>, vector<2x128xf32>
      tpu.vector_store %arg22[%c0_84, %c0_85], %184 {strides = array<i32>} : memref<2x128xf32, #tpu.memory_space<vmem>>, vector<2x128xf32>,
    } else {
    }
    return
  }
  func.func @transform_0(%arg0: i32, %arg1: i32) -> (i32, i32, i32) {
    %c0_i32 = arith.constant 0 : i32
    %c0_i32_0 = arith.constant 0 : i32
    %c0_i32_1 = arith.constant 0 : i32
    return %arg0, %c0_i32, %c0_i32_0 : i32, i32, i32
  }
  func.func @transform_1(%arg0: i32, %arg1: i32) -> (i32, i32, i32) {
    %c0_i32 = arith.constant 0 : i32
    %c0_i32_0 = arith.constant 0 : i32
    %c0_i32_1 = arith.constant 0 : i32
    return %arg0, %c0_i32, %c0_i32_0 : i32, i32, i32
  }
  func.func @transform_2(%arg0: i32, %arg1: i32) -> (i32, i32) {
    %c0_i32 = arith.constant 0 : i32
    %c0_i32_0 = arith.constant 0 : i32
    %c0_i32_1 = arith.constant 0 : i32
    return %c0_i32, %c0_i32_0 : i32, i32
  }
  func.func @transform_3(%arg0: i32, %arg1: i32) -> (i32, i32) {
    %c0_i32 = arith.constant 0 : i32
    %c0_i32_0 = arith.constant 0 : i32
    %c0_i32_1 = arith.constant 0 : i32
    return %c0_i32, %c0_i32_0 : i32, i32
  }
  func.func @transform_4(%arg0: i32, %arg1: i32) -> (i32, i32, i32) {
    %c0_i32 = arith.constant 0 : i32
    %c0_i32_0 = arith.constant 0 : i32
    %c0_i32_1 = arith.constant 0 : i32
    return %arg1, %c0_i32, %c0_i32_0 : i32, i32, i32
  }
  func.func @transform_5(%arg0: i32, %arg1: i32) -> (i32, i32, i32) {
    %c0_i32 = arith.constant 0 : i32
    %c0_i32_0 = arith.constant 0 : i32
    %c0_i32_1 = arith.constant 0 : i32
    return %arg1, %c0_i32, %c0_i32_0 : i32, i32, i32
  }
  func.func @transform_6(%arg0: i32, %arg1: i32) -> (i32, i32, i32) {
    %c0_i32 = arith.constant 0 : i32
    %c0_i32_0 = arith.constant 0 : i32
    %c0_i32_1 = arith.constant 0 : i32
    return %arg1, %c0_i32, %c0_i32_0 : i32, i32, i32
  }
  func.func @transform_7(%arg0: i32, %arg1: i32) -> (i32, i32, i32) {
    %c0_i32 = arith.constant 0 : i32
    %c0_i32_0 = arith.constant 0 : i32
    %c0_i32_1 = arith.constant 0 : i32
    return %arg1, %c0_i32, %c0_i32_0 : i32, i32, i32
  }
  func.func @transform_8(%arg0: i32, %arg1: i32) -> (i32, i32, i32) {
    %c0_i32 = arith.constant 0 : i32
    %c0_i32_0 = arith.constant 0 : i32
    %c0_i32_1 = arith.constant 0 : i32
    return %arg1, %c0_i32, %c0_i32_0 : i32, i32, i32
  }
  func.func @transform_9(%arg0: i32, %arg1: i32) -> (i32, i32, i32) {
    %c0_i32 = arith.constant 0 : i32
    %c0_i32_0 = arith.constant 0 : i32
    %c0_i32_1 = arith.constant 0 : i32
    return %arg1, %c0_i32, %c0_i32_0 : i32, i32, i32
  }
  func.func @transform_10(%arg0: i32, %arg1: i32) -> (i32, i32, i32) {
    %c0_i32 = arith.constant 0 : i32
    %c0_i32_0 = arith.constant 0 : i32
    %c0_i32_1 = arith.constant 0 : i32
    return %arg1, %c0_i32, %c0_i32_0 : i32, i32, i32
  }
  func.func @transform_11(%arg0: i32, %arg1: i32) -> (i32, i32, i32) {
    %c0_i32 = arith.constant 0 : i32
    %c0_i32_0 = arith.constant 0 : i32
    %c0_i32_1 = arith.constant 0 : i32
    return %arg1, %c0_i32, %c0_i32_0 : i32, i32, i32
  }
  func.func @transform_12(%arg0: i32, %arg1: i32) -> (i32, i32, i32) {
    %c0_i32 = arith.constant 0 : i32
    %c0_i32_0 = arith.constant 0 : i32
    %c0_i32_1 = arith.constant 0 : i32
    return %arg1, %c0_i32, %c0_i32_0 : i32, i32, i32
  }
  func.func @transform_13(%arg0: i32, %arg1: i32) -> (i32, i32, i32) {
    %c0_i32 = arith.constant 0 : i32
    %c0_i32_0 = arith.constant 0 : i32
    %c0_i32_1 = arith.constant 0 : i32
    return %arg1, %c0_i32, %c0_i32_0 : i32, i32, i32
  }
  func.func @transform_14(%arg0: i32, %arg1: i32) -> (i32, i32, i32) {
    %c0_i32 = arith.constant 0 : i32
    %c0_i32_0 = arith.constant 0 : i32
    %c0_i32_1 = arith.constant 0 : i32
    return %arg1, %c0_i32, %c0_i32_0 : i32, i32, i32
  }
  func.func @transform_15(%arg0: i32, %arg1: i32) -> (i32, i32, i32) {
    %c0_i32 = arith.constant 0 : i32
    %c0_i32_0 = arith.constant 0 : i32
    %c0_i32_1 = arith.constant 0 : i32
    return %arg1, %c0_i32, %c0_i32_0 : i32, i32, i32
  }
  func.func @transform_16(%arg0: i32, %arg1: i32) -> (i32, i32) {
    %c0_i32 = arith.constant 0 : i32
    %c0_i32_0 = arith.constant 0 : i32
    %c0_i32_1 = arith.constant 0 : i32
    return %c0_i32, %c0_i32_0 : i32, i32
  }
  func.func @transform_17(%arg0: i32, %arg1: i32) -> (i32, i32) {
    %c0_i32 = arith.constant 0 : i32
    %c0_i32_0 = arith.constant 0 : i32
    %c0_i32_1 = arith.constant 0 : i32
    return %c0_i32, %c0_i32_0 : i32, i32
  }
  func.func @transform_18(%arg0: i32, %arg1: i32) -> (i32, i32) {
    %c0_i32 = arith.constant 0 : i32
    %c0_i32_0 = arith.constant 0 : i32
    %c0_i32_1 = arith.constant 0 : i32
    return %c0_i32, %c0_i32_0 : i32, i32
  }
  func.func @transform_19(%arg0: i32, %arg1: i32) -> (i32, i32) {
    %c0_i32 = arith.constant 0 : i32
    %c0_i32_0 = arith.constant 0 : i32
    %c0_i32_1 = arith.constant 0 : i32
    return %c0_i32, %c0_i32_0 : i32, i32
  }
  func.func @transform_20(%arg0: i32, %arg1: i32) -> (i32, i32) {
    %c0_i32 = arith.constant 0 : i32
    %c0_i32_0 = arith.constant 0 : i32
    return %arg0, %c0_i32 : i32, i32
  }
}

</mosaic_0001>

<llo_original>
// kernel: predict_sentiment.1
$region0: #{predict_sentiment.1}
  #allocation0 [shape = 'u32[]', space=smem, size = 0x4, offset = 0x4, fixed_abs, tag = 'smem constant byte address 0x4 - core index']
  #allocation1 [shape = 'u32[144,128]{1,0:T(1,128)}', space=vmem, size = 0x12000, scoped, tag = 'internal scratch']
  #allocation2 [shape = 'f32[16,32]{1,0:T(8,128)}', space=vmem, size = 0x2000, scoped, tag = 'scratch operand']
  %s0 = inlined_call_operand.vmem [shape: f32[2,8,32], index: 0, kind: input, shape index: {}]
  %s1 = inlined_call_operand.vmem [shape: f32[2,1,8], index: 1, kind: input, shape index: {}]
  %s2 = inlined_call_operand.vmem [shape: f32[1,32], index: 2, kind: input, shape index: {}]
  %s3 = inlined_call_operand.vmem [shape: f32[1,32], index: 3, kind: input, shape index: {}]
  %s4 = inlined_call_operand.vmem [shape: bf16[2,32,128], index: 4, kind: input, shape index: {}]
  %s5 = inlined_call_operand.vmem [shape: f32[2,1,128], index: 5, kind: input, shape index: {}]
  %s6 = inlined_call_operand.vmem [shape: bf16[2,32,32], index: 6, kind: input, shape index: {}]
  %s7 = inlined_call_operand.vmem [shape: f32[2,1,32], index: 7, kind: input, shape index: {}]
  %s8 = inlined_call_operand.vmem [shape: f32[2,1,32], index: 8, kind: input, shape index: {}]
  %s9 = inlined_call_operand.vmem [shape: f32[2,1,32], index: 9, kind: input, shape index: {}]
  %s10 = inlined_call_operand.vmem [shape: bf16[2,32,64], index: 10, kind: input, shape index: {}]
  %s11 = inlined_call_operand.vmem [shape: f32[2,1,64], index: 11, kind: input, shape index: {}]
  %s12 = inlined_call_operand.vmem [shape: bf16[2,64,32], index: 12, kind: input, shape index: {}]
  %s13 = inlined_call_operand.vmem [shape: f32[2,1,32], index: 13, kind: input, shape index: {}]
  %s14 = inlined_call_operand.vmem [shape: f32[2,1,32], index: 14, kind: input, shape index: {}]
  %s15 = inlined_call_operand.vmem [shape: f32[2,1,32], index: 15, kind: input, shape index: {}]
  %s16 = inlined_call_operand.vmem [shape: bf16[32,32], index: 16, kind: input, shape index: {}]
  %s17 = inlined_call_operand.vmem [shape: f32[1,32], index: 17, kind: input, shape index: {}]
  %s18 = inlined_call_operand.vmem [shape: bf16[32,96], index: 18, kind: input, shape index: {}]
  %s19 = inlined_call_operand.vmem [shape: f32[1,96], index: 19, kind: input, shape index: {}]
  %s20 = inlined_call_operand.hbm [shape: f32[2,128], index: 20, kind: output, shape index: {}]
  %s21 = sld [smem:[#allocation0]]
  $region121: #{predict_sentiment.1} parent=0
    _
  %s23 = ssub.s32 1, %s21
  %s24 = scalar_select 0, %s23, %s21
  $region1: #{predict_sentiment.1} parent=0
    #allocation3 [shape = 'u8[1024]{0}', space=vmem, size = 0x400, scoped, tag = 'output window, operand 0, single buffered']
    #allocation4 [shape = 's32[2]{0}', space=sflag, size = 0x8, scoped, tag = 'scoped memory for predict_sentiment.1']
    %25 = vsyncpa [#allocation4], 0
    loop: start=0, step=1, limit=4
    $region2: #{predict_sentiment.1} parent=1 // loop_pre_header
      _
    $region3: #{predict_sentiment.1} parent=1 // loop_header
      %s27 = sphi 0, %s31
      %p28 = scmp.ge.s32.totalorder %s27, 4
      %s34 = sphi 0, %s46
      %s35 = sphi 0, %s42
      %s36 = sphi 0, %s34
      %s37 = sphi 0, %s35
      %s38 = sphi 0, %s36
      %s39 = sphi 0, %s37
      %s49 = sphi 0, %s51
      %s52 = sphi 0, %s49
      %s53 = sphi 0, %s52
      %s69 = sphi 0, %s53
      %s75 = sphi 0, %s77
      %s78 = sphi 0, %s75
      %s79 = sphi 0, %s78
      %s95 = sphi 0, %s79
      %s99 = sphi 0, %s99
      %s101 = sphi 0, %s99
      %s102 = sphi 0, %s101
      %s116 = sphi 0, %s102
      %s120 = sphi 0, %s120
      %s122 = sphi 0, %s120
      %s123 = sphi 0, %s122
      %s137 = sphi 0, %s123
      %s143 = sphi 0, %s145
      %s146 = sphi 0, %s143
      %s147 = sphi 0, %s146
      %s163 = sphi 0, %s147
      %s169 = sphi 0, %s171
      %s172 = sphi 0, %s169
      %s173 = sphi 0, %s172
      %s189 = sphi 0, %s173
      %s195 = sphi 0, %s197
      %s198 = sphi 0, %s195
      %s199 = sphi 0, %s198
      %s215 = sphi 0, %s199
      %s221 = sphi 0, %s223
      %s224 = sphi 0, %s221
      %s225 = sphi 0, %s224
      %s241 = sphi 0, %s225
      %s247 = sphi 0, %s249
      %s250 = sphi 0, %s247
      %s251 = sphi 0, %s250
      %s267 = sphi 0, %s251
      %s273 = sphi 0, %s275
      %s276 = sphi 0, %s273
      %s277 = sphi 0, %s276
      %s293 = sphi 0, %s277
      %s299 = sphi 0, %s301
      %s302 = sphi 0, %s299
      %s303 = sphi 0, %s302
      %s319 = sphi 0, %s303
      %s325 = sphi 0, %s327
      %s328 = sphi 0, %s325
      %s329 = sphi 0, %s328
      %s345 = sphi 0, %s329
      %s351 = sphi 0, %s353
      %s354 = sphi 0, %s351
      %s355 = sphi 0, %s354
      %s371 = sphi 0, %s355
      %s377 = sphi 0, %s379
      %s380 = sphi 0, %s377
      %s381 = sphi 0, %s380
      %s397 = sphi 0, %s381
      %s403 = sphi 0, %s405
      %s406 = sphi 0, %s403
      %s407 = sphi 0, %s406
      %s423 = sphi 0, %s407
      %s429 = sphi 0, %s431
      %s432 = sphi 0, %s429
      %s433 = sphi 0, %s432
      %s449 = sphi 0, %s433
      %s453 = sphi 0, %s453
      %s455 = sphi 0, %s453
      %s456 = sphi 0, %s455
      %s470 = sphi 0, %s456
      %s474 = sphi 0, %s474
      %s476 = sphi 0, %s474
      %s477 = sphi 0, %s476
      %s491 = sphi 0, %s477
      %s495 = sphi 0, %s495
      %s497 = sphi 0, %s495
      %s498 = sphi 0, %s497
      %s512 = sphi 0, %s498
      %s516 = sphi 0, %s516
      %s518 = sphi 0, %s516
      %s519 = sphi 0, %s518
      %s533 = sphi 0, %s519
      %s539 = sphi 0, %s541
      %s542 = sphi 0, %s539
      %s543 = sphi 0, %s542
      %s559 = sphi 0, %s543
    $region4: #{predict_sentiment.1} parent=1 // loop_header_branch
      %30 = sbr.rel (%p28) target = $region8
    $region5: #{predict_sentiment.1} parent=1 // loop_body
      %s32 = ssub.s32 %s27, 1
      %s33 = ssub.s32 %s27, 2
      %s40 = sadd.s32 1, %s35
      %p41 = scmp.ge.s32.totalorder %s40, 2
      %s42 = scalar_select %p41, 0, %s40
      %s43 = sadd.s32 1, %s34
      %s44 = scalar_select %p41, %s43, %s34
      %p45 = scmp.ge.s32.totalorder %s44, 1
      %s46 = scalar_select %p45, 0, %s44
      %s47 = ssub.s32 %s34, %s46
      %p48 = scmp.eq.s32.totalorder %s47, 0
      %s50 = sadd.s32 %s49, 1
      %s51 = scalar_select %p48, %s49, %s50
      %p54 = pneg %p48
      %p55 = scmp.eq.s32.totalorder %s27, 1
      %p56 = por %p54, %p55
      %p57 = scmp.ne.s32.totalorder %s49, %s52
      %p58 = scmp.eq.s32.totalorder %s27, 0
      %p59 = por %p57, %p58
      %p60 = scmp.ne.s32.totalorder %s49, %s52
      %p61 = scmp.eq.s32.totalorder %s32, 1
      %p62 = por %p60, %p61
      %p63 = scmp.ne.s32.totalorder %s52, %s53
      %p64 = scmp.eq.s32.totalorder %s32, 0
      %p65 = por %p63, %p64
      %p66 = scmp.ne.s32.totalorder %s52, %s53
      %p67 = scmp.eq.s32.totalorder %s33, 1
      %p68 = por %p66, %p67
      %p70 = scmp.ne.s32.totalorder %s53, %s69
      %p71 = scmp.eq.s32.totalorder %s33, 0
      %p72 = por %p70, %p71
      %s73 = ssub.s32 %s34, %s46
      %p74 = scmp.eq.s32.totalorder %s73, 0
      %s76 = sadd.s32 %s75, 1
      %s77 = scalar_select %p74, %s75, %s76
      %p80 = pneg %p74
      %p81 = scmp.eq.s32.totalorder %s27, 1
      %p82 = por %p80, %p81
      %p83 = scmp.ne.s32.totalorder %s75, %s78
      %p84 = scmp.eq.s32.totalorder %s27, 0
      %p85 = por %p83, %p84
      %p86 = scmp.ne.s32.totalorder %s75, %s78
      %p87 = scmp.eq.s32.totalorder %s32, 1
      %p88 = por %p86, %p87
      %p89 = scmp.ne.s32.totalorder %s78, %s79
      %p90 = scmp.eq.s32.totalorder %s32, 0
      %p91 = por %p89, %p90
      %p92 = scmp.ne.s32.totalorder %s78, %s79
      %p93 = scmp.eq.s32.totalorder %s33, 1
      %p94 = por %p92, %p93
      %p96 = scmp.ne.s32.totalorder %s79, %s95
      %p97 = scmp.eq.s32.totalorder %s33, 0
      %p98 = por %p96, %p97
      %s100 = sadd.s32 %s99, 1
      %p103 = scmp.eq.s32.totalorder %s27, 1
      %p104 = scmp.ne.s32.totalorder %s99, %s101
      %p105 = scmp.eq.s32.totalorder %s27, 0
      %p106 = por %p104, %p105
      %p107 = scmp.ne.s32.totalorder %s99, %s101
      %p108 = scmp.eq.s32.totalorder %s32, 1
      %p109 = por %p107, %p108
      %p110 = scmp.ne.s32.totalorder %s101, %s102
      %p111 = scmp.eq.s32.totalorder %s32, 0
      %p112 = por %p110, %p111
      %p113 = scmp.ne.s32.totalorder %s101, %s102
      %p114 = scmp.eq.s32.totalorder %s33, 1
      %p115 = por %p113, %p114
      %p117 = scmp.ne.s32.totalorder %s102, %s116
      %p118 = scmp.eq.s32.totalorder %s33, 0
      %p119 = por %p117, %p118
      %s121 = sadd.s32 %s120, 1
      %p124 = scmp.eq.s32.totalorder %s27, 1
      %p125 = scmp.ne.s32.totalorder %s120, %s122
      %p126 = scmp.eq.s32.totalorder %s27, 0
      %p127 = por %p125, %p126
      %p128 = scmp.ne.s32.totalorder %s120, %s122
      %p129 = scmp.eq.s32.totalorder %s32, 1
      %p130 = por %p128, %p129
      %p131 = scmp.ne.s32.totalorder %s122, %s123
      %p132 = scmp.eq.s32.totalorder %s32, 0
      %p133 = por %p131, %p132
      %p134 = scmp.ne.s32.totalorder %s122, %s123
      %p135 = scmp.eq.s32.totalorder %s33, 1
      %p136 = por %p134, %p135
      %p138 = scmp.ne.s32.totalorder %s123, %s137
      %p139 = scmp.eq.s32.totalorder %s33, 0
      %p140 = por %p138, %p139
      %s141 = ssub.s32 %s35, %s42
      %p142 = scmp.eq.s32.totalorder %s141, 0
      %s144 = sadd.s32 %s143, 1
      %s145 = scalar_select %p142, %s143, %s144
      %p148 = pneg %p142
      %p149 = scmp.eq.s32.totalorder %s27, 1
      %p150 = por %p148, %p149
      %p151 = scmp.ne.s32.totalorder %s143, %s146
      %p152 = scmp.eq.s32.totalorder %s27, 0
      %p153 = por %p151, %p152
      %p154 = scmp.ne.s32.totalorder %s143, %s146
      %p155 = scmp.eq.s32.totalorder %s32, 1
      %p156 = por %p154, %p155
      %p157 = scmp.ne.s32.totalorder %s146, %s147
      %p158 = scmp.eq.s32.totalorder %s32, 0
      %p159 = por %p157, %p158
      %p160 = scmp.ne.s32.totalorder %s146, %s147
      %p161 = scmp.eq.s32.totalorder %s33, 1
      %p162 = por %p160, %p161
      %p164 = scmp.ne.s32.totalorder %s147, %s163
      %p165 = scmp.eq.s32.totalorder %s33, 0
      %p166 = por %p164, %p165
      %s167 = ssub.s32 %s35, %s42
      %p168 = scmp.eq.s32.totalorder %s167, 0
      %s170 = sadd.s32 %s169, 1
      %s171 = scalar_select %p168, %s169, %s170
      %p174 = pneg %p168
      %p175 = scmp.eq.s32.totalorder %s27, 1
      %p176 = por %p174, %p175
      %p177 = scmp.ne.s32.totalorder %s169, %s172
      %p178 = scmp.eq.s32.totalorder %s27, 0
      %p179 = por %p177, %p178
      %p180 = scmp.ne.s32.totalorder %s169, %s172
      %p181 = scmp.eq.s32.totalorder %s32, 1
      %p182 = por %p180, %p181
      %p183 = scmp.ne.s32.totalorder %s172, %s173
      %p184 = scmp.eq.s32.totalorder %s32, 0
      %p185 = por %p183, %p184
      %p186 = scmp.ne.s32.totalorder %s172, %s173
      %p187 = scmp.eq.s32.totalorder %s33, 1
      %p188 = por %p186, %p187
      %p190 = scmp.ne.s32.totalorder %s173, %s189
      %p191 = scmp.eq.s32.totalorder %s33, 0
      %p192 = por %p190, %p191
      %s193 = ssub.s32 %s35, %s42
      %p194 = scmp.eq.s32.totalorder %s193, 0
      %s196 = sadd.s32 %s195, 1
      %s197 = scalar_select %p194, %s195, %s196
      %p200 = pneg %p194
      %p201 = scmp.eq.s32.totalorder %s27, 1
      %p202 = por %p200, %p201
      %p203 = scmp.ne.s32.totalorder %s195, %s198
      %p204 = scmp.eq.s32.totalorder %s27, 0
      %p205 = por %p203, %p204
      %p206 = scmp.ne.s32.totalorder %s195, %s198
      %p207 = scmp.eq.s32.totalorder %s32, 1
      %p208 = por %p206, %p207
      %p209 = scmp.ne.s32.totalorder %s198, %s199
      %p210 = scmp.eq.s32.totalorder %s32, 0
      %p211 = por %p209, %p210
      %p212 = scmp.ne.s32.totalorder %s198, %s199
      %p213 = scmp.eq.s32.totalorder %s33, 1
      %p214 = por %p212, %p213
      %p216 = scmp.ne.s32.totalorder %s199, %s215
      %p217 = scmp.eq.s32.totalorder %s33, 0
      %p218 = por %p216, %p217
      %s219 = ssub.s32 %s35, %s42
      %p220 = scmp.eq.s32.totalorder %s219, 0
      %s222 = sadd.s32 %s221, 1
      %s223 = scalar_select %p220, %s221, %s222
      %p226 = pneg %p220
      %p227 = scmp.eq.s32.totalorder %s27, 1
      %p228 = por %p226, %p227
      %p229 = scmp.ne.s32.totalorder %s221, %s224
      %p230 = scmp.eq.s32.totalorder %s27, 0
      %p231 = por %p229, %p230
      %p232 = scmp.ne.s32.totalorder %s221, %s224
      %p233 = scmp.eq.s32.totalorder %s32, 1
      %p234 = por %p232, %p233
      %p235 = scmp.ne.s32.totalorder %s224, %s225
      %p236 = scmp.eq.s32.totalorder %s32, 0
      %p237 = por %p235, %p236
      %p238 = scmp.ne.s32.totalorder %s224, %s225
      %p239 = scmp.eq.s32.totalorder %s33, 1
      %p240 = por %p238, %p239
      %p242 = scmp.ne.s32.totalorder %s225, %s241
      %p243 = scmp.eq.s32.totalorder %s33, 0
      %p244 = por %p242, %p243
      %s245 = ssub.s32 %s35, %s42
      %p246 = scmp.eq.s32.totalorder %s245, 0
      %s248 = sadd.s32 %s247, 1
      %s249 = scalar_select %p246, %s247, %s248
      %p252 = pneg %p246
      %p253 = scmp.eq.s32.totalorder %s27, 1
      %p254 = por %p252, %p253
      %p255 = scmp.ne.s32.totalorder %s247, %s250
      %p256 = scmp.eq.s32.totalorder %s27, 0
      %p257 = por %p255, %p256
      %p258 = scmp.ne.s32.totalorder %s247, %s250
      %p259 = scmp.eq.s32.totalorder %s32, 1
      %p260 = por %p258, %p259
      %p261 = scmp.ne.s32.totalorder %s250, %s251
      %p262 = scmp.eq.s32.totalorder %s32, 0
      %p263 = por %p261, %p262
      %p264 = scmp.ne.s32.totalorder %s250, %s251
      %p265 = scmp.eq.s32.totalorder %s33, 1
      %p266 = por %p264, %p265
      %p268 = scmp.ne.s32.totalorder %s251, %s267
      %p269 = scmp.eq.s32.totalorder %s33, 0
      %p270 = por %p268, %p269
      %s271 = ssub.s32 %s35, %s42
      %p272 = scmp.eq.s32.totalorder %s271, 0
      %s274 = sadd.s32 %s273, 1
      %s275 = scalar_select %p272, %s273, %s274
      %p278 = pneg %p272
      %p279 = scmp.eq.s32.totalorder %s27, 1
      %p280 = por %p278, %p279
      %p281 = scmp.ne.s32.totalorder %s273, %s276
      %p282 = scmp.eq.s32.totalorder %s27, 0
      %p283 = por %p281, %p282
      %p284 = scmp.ne.s32.totalorder %s273, %s276
      %p285 = scmp.eq.s32.totalorder %s32, 1
      %p286 = por %p284, %p285
      %p287 = scmp.ne.s32.totalorder %s276, %s277
      %p288 = scmp.eq.s32.totalorder %s32, 0
      %p289 = por %p287, %p288
      %p290 = scmp.ne.s32.totalorder %s276, %s277
      %p291 = scmp.eq.s32.totalorder %s33, 1
      %p292 = por %p290, %p291
      %p294 = scmp.ne.s32.totalorder %s277, %s293
      %p295 = scmp.eq.s32.totalorder %s33, 0
      %p296 = por %p294, %p295
      %s297 = ssub.s32 %s35, %s42
      %p298 = scmp.eq.s32.totalorder %s297, 0
      %s300 = sadd.s32 %s299, 1
      %s301 = scalar_select %p298, %s299, %s300
      %p304 = pneg %p298
      %p305 = scmp.eq.s32.totalorder %s27, 1
      %p306 = por %p304, %p305
      %p307 = scmp.ne.s32.totalorder %s299, %s302
      %p308 = scmp.eq.s32.totalorder %s27, 0
      %p309 = por %p307, %p308
      %p310 = scmp.ne.s32.totalorder %s299, %s302
      %p311 = scmp.eq.s32.totalorder %s32, 1
      %p312 = por %p310, %p311
      %p313 = scmp.ne.s32.totalorder %s302, %s303
      %p314 = scmp.eq.s32.totalorder %s32, 0
      %p315 = por %p313, %p314
      %p316 = scmp.ne.s32.totalorder %s302, %s303
      %p317 = scmp.eq.s32.totalorder %s33, 1
      %p318 = por %p316, %p317
      %p320 = scmp.ne.s32.totalorder %s303, %s319
      %p321 = scmp.eq.s32.totalorder %s33, 0
      %p322 = por %p320, %p321
      %s323 = ssub.s32 %s35, %s42
      %p324 = scmp.eq.s32.totalorder %s323, 0
      %s326 = sadd.s32 %s325, 1
      %s327 = scalar_select %p324, %s325, %s326
      %p330 = pneg %p324
      %p331 = scmp.eq.s32.totalorder %s27, 1
      %p332 = por %p330, %p331
      %p333 = scmp.ne.s32.totalorder %s325, %s328
      %p334 = scmp.eq.s32.totalorder %s27, 0
      %p335 = por %p333, %p334
      %p336 = scmp.ne.s32.totalorder %s325, %s328
      %p337 = scmp.eq.s32.totalorder %s32, 1
      %p338 = por %p336, %p337
      %p339 = scmp.ne.s32.totalorder %s328, %s329
      %p340 = scmp.eq.s32.totalorder %s32, 0
      %p341 = por %p339, %p340
      %p342 = scmp.ne.s32.totalorder %s328, %s329
      %p343 = scmp.eq.s32.totalorder %s33, 1
      %p344 = por %p342, %p343
      %p346 = scmp.ne.s32.totalorder %s329, %s345
      %p347 = scmp.eq.s32.totalorder %s33, 0
      %p348 = por %p346, %p347
      %s349 = ssub.s32 %s35, %s42
      %p350 = scmp.eq.s32.totalorder %s349, 0
      %s352 = sadd.s32 %s351, 1
      %s353 = scalar_select %p350, %s351, %s352
      %p356 = pneg %p350
      %p357 = scmp.eq.s32.totalorder %s27, 1
      %p358 = por %p356, %p357
      %p359 = scmp.ne.s32.totalorder %s351, %s354
      %p360 = scmp.eq.s32.totalorder %s27, 0
      %p361 = por %p359, %p360
      %p362 = scmp.ne.s32.totalorder %s351, %s354
      %p363 = scmp.eq.s32.totalorder %s32, 1
      %p364 = por %p362, %p363
      %p365 = scmp.ne.s32.totalorder %s354, %s355
      %p366 = scmp.eq.s32.totalorder %s32, 0
      %p367 = por %p365, %p366
      %p368 = scmp.ne.s32.totalorder %s354, %s355
      %p369 = scmp.eq.s32.totalorder %s33, 1
      %p370 = por %p368, %p369
      %p372 = scmp.ne.s32.totalorder %s355, %s371
      %p373 = scmp.eq.s32.totalorder %s33, 0
      %p374 = por %p372, %p373
      %s375 = ssub.s32 %s35, %s42
      %p376 = scmp.eq.s32.totalorder %s375, 0
      %s378 = sadd.s32 %s377, 1
      %s379 = scalar_select %p376, %s377, %s378
      %p382 = pneg %p376
      %p383 = scmp.eq.s32.totalorder %s27, 1
      %p384 = por %p382, %p383
      %p385 = scmp.ne.s32.totalorder %s377, %s380
      %p386 = scmp.eq.s32.totalorder %s27, 0
      %p387 = por %p385, %p386
      %p388 = scmp.ne.s32.totalorder %s377, %s380
      %p389 = scmp.eq.s32.totalorder %s32, 1
      %p390 = por %p388, %p389
      %p391 = scmp.ne.s32.totalorder %s380, %s381
      %p392 = scmp.eq.s32.totalorder %s32, 0
      %p393 = por %p391, %p392
      %p394 = scmp.ne.s32.totalorder %s380, %s381
      %p395 = scmp.eq.s32.totalorder %s33, 1
      %p396 = por %p394, %p395
      %p398 = scmp.ne.s32.totalorder %s381, %s397
      %p399 = scmp.eq.s32.totalorder %s33, 0
      %p400 = por %p398, %p399
      %s401 = ssub.s32 %s35, %s42
      %p402 = scmp.eq.s32.totalorder %s401, 0
      %s404 = sadd.s32 %s403, 1
      %s405 = scalar_select %p402, %s403, %s404
      %p408 = pneg %p402
      %p409 = scmp.eq.s32.totalorder %s27, 1
      %p410 = por %p408, %p409
      %p411 = scmp.ne.s32.totalorder %s403, %s406
      %p412 = scmp.eq.s32.totalorder %s27, 0
      %p413 = por %p411, %p412
      %p414 = scmp.ne.s32.totalorder %s403, %s406
      %p415 = scmp.eq.s32.totalorder %s32, 1
      %p416 = por %p414, %p415
      %p417 = scmp.ne.s32.totalorder %s406, %s407
      %p418 = scmp.eq.s32.totalorder %s32, 0
      %p419 = por %p417, %p418
      %p420 = scmp.ne.s32.totalorder %s406, %s407
      %p421 = scmp.eq.s32.totalorder %s33, 1
      %p422 = por %p420, %p421
      %p424 = scmp.ne.s32.totalorder %s407, %s423
      %p425 = scmp.eq.s32.totalorder %s33, 0
      %p426 = por %p424, %p425
      %s427 = ssub.s32 %s35, %s42
      %p428 = scmp.eq.s32.totalorder %s427, 0
      %s430 = sadd.s32 %s429, 1
      %s431 = scalar_select %p428, %s429, %s430
      %p434 = pneg %p428
      %p435 = scmp.eq.s32.totalorder %s27, 1
      %p436 = por %p434, %p435
      %p437 = scmp.ne.s32.totalorder %s429, %s432
      %p438 = scmp.eq.s32.totalorder %s27, 0
      %p439 = por %p437, %p438
      %p440 = scmp.ne.s32.totalorder %s429, %s432
      %p441 = scmp.eq.s32.totalorder %s32, 1
      %p442 = por %p440, %p441
      %p443 = scmp.ne.s32.totalorder %s432, %s433
      %p444 = scmp.eq.s32.totalorder %s32, 0
      %p445 = por %p443, %p444
      %p446 = scmp.ne.s32.totalorder %s432, %s433
      %p447 = scmp.eq.s32.totalorder %s33, 1
      %p448 = por %p446, %p447
      %p450 = scmp.ne.s32.totalorder %s433, %s449
      %p451 = scmp.eq.s32.totalorder %s33, 0
      %p452 = por %p450, %p451
      %s454 = sadd.s32 %s453, 1
      %p457 = scmp.eq.s32.totalorder %s27, 1
      %p458 = scmp.ne.s32.totalorder %s453, %s455
      %p459 = scmp.eq.s32.totalorder %s27, 0
      %p460 = por %p458, %p459
      %p461 = scmp.ne.s32.totalorder %s453, %s455
      %p462 = scmp.eq.s32.totalorder %s32, 1
      %p463 = por %p461, %p462
      %p464 = scmp.ne.s32.totalorder %s455, %s456
      %p465 = scmp.eq.s32.totalorder %s32, 0
      %p466 = por %p464, %p465
      %p467 = scmp.ne.s32.totalorder %s455, %s456
      %p468 = scmp.eq.s32.totalorder %s33, 1
      %p469 = por %p467, %p468
      %p471 = scmp.ne.s32.totalorder %s456, %s470
      %p472 = scmp.eq.s32.totalorder %s33, 0
      %p473 = por %p471, %p472
      %s475 = sadd.s32 %s474, 1
      %p478 = scmp.eq.s32.totalorder %s27, 1
      %p479 = scmp.ne.s32.totalorder %s474, %s476
      %p480 = scmp.eq.s32.totalorder %s27, 0
      %p481 = por %p479, %p480
      %p482 = scmp.ne.s32.totalorder %s474, %s476
      %p483 = scmp.eq.s32.totalorder %s32, 1
      %p484 = por %p482, %p483
      %p485 = scmp.ne.s32.totalorder %s476, %s477
      %p486 = scmp.eq.s32.totalorder %s32, 0
      %p487 = por %p485, %p486
      %p488 = scmp.ne.s32.totalorder %s476, %s477
      %p489 = scmp.eq.s32.totalorder %s33, 1
      %p490 = por %p488, %p489
      %p492 = scmp.ne.s32.totalorder %s477, %s491
      %p493 = scmp.eq.s32.totalorder %s33, 0
      %p494 = por %p492, %p493
      %s496 = sadd.s32 %s495, 1
      %p499 = scmp.eq.s32.totalorder %s27, 1
      %p500 = scmp.ne.s32.totalorder %s495, %s497
      %p501 = scmp.eq.s32.totalorder %s27, 0
      %p502 = por %p500, %p501
      %p503 = scmp.ne.s32.totalorder %s495, %s497
      %p504 = scmp.eq.s32.totalorder %s32, 1
      %p505 = por %p503, %p504
      %p506 = scmp.ne.s32.totalorder %s497, %s498
      %p507 = scmp.eq.s32.totalorder %s32, 0
      %p508 = por %p506, %p507
      %p509 = scmp.ne.s32.totalorder %s497, %s498
      %p510 = scmp.eq.s32.totalorder %s33, 1
      %p511 = por %p509, %p510
      %p513 = scmp.ne.s32.totalorder %s498, %s512
      %p514 = scmp.eq.s32.totalorder %s33, 0
      %p515 = por %p513, %p514
      %s517 = sadd.s32 %s516, 1
      %p520 = scmp.eq.s32.totalorder %s27, 1
      %p521 = scmp.ne.s32.totalorder %s516, %s518
      %p522 = scmp.eq.s32.totalorder %s27, 0
      %p523 = por %p521, %p522
      %p524 = scmp.ne.s32.totalorder %s516, %s518
      %p525 = scmp.eq.s32.totalorder %s32, 1
      %p526 = por %p524, %p525
      %p527 = scmp.ne.s32.totalorder %s518, %s519
      %p528 = scmp.eq.s32.totalorder %s32, 0
      %p529 = por %p527, %p528
      %p530 = scmp.ne.s32.totalorder %s518, %s519
      %p531 = scmp.eq.s32.totalorder %s33, 1
      %p532 = por %p530, %p531
      %p534 = scmp.ne.s32.totalorder %s519, %s533
      %p535 = scmp.eq.s32.totalorder %s33, 0
      %p536 = por %p534, %p535
      %s537 = ssub.s32 %s34, %s46
      %p538 = scmp.eq.s32.totalorder %s537, 0
      %s540 = sadd.s32 %s539, 1
      %s541 = scalar_select %p538, %s539, %s540
      %p544 = pneg %p538
      %p545 = scmp.eq.s32.totalorder %s27, 1
      %p546 = por %p544, %p545
      %p547 = scmp.ne.s32.totalorder %s539, %s542
      %p548 = scmp.eq.s32.totalorder %s27, 0
      %p549 = por %p547, %p548
      %p550 = scmp.ne.s32.totalorder %s539, %s542
      %p551 = scmp.eq.s32.totalorder %s32, 1
      %p552 = por %p550, %p551
      %p553 = scmp.ne.s32.totalorder %s542, %s543
      %p554 = scmp.eq.s32.totalorder %s32, 0
      %p555 = por %p553, %p554
      %p556 = scmp.ne.s32.totalorder %s542, %s543
      %p557 = scmp.eq.s32.totalorder %s33, 1
      %p558 = por %p556, %p557
      %p560 = scmp.ne.s32.totalorder %s543, %s559
      %p561 = scmp.eq.s32.totalorder %s33, 0
      %p562 = por %p560, %p561
      %p563 = scmp.le.s32.totalorder 1, %s27
      %p564 = scmp.lt.s32.totalorder %s27, 3
      %p565 = pnand %p563, %p564
      %p566 = pneg %p565
      // Predicated region
      $region9: #{predict_sentiment.1} parent=5 // pred_check
        _
      $region10: #{predict_sentiment.1} parent=5 // pred_check_branch
        %568 = sbr.rel (%p565) target = $region12
      $region11: #{predict_sentiment.1} parent=5 // pred_region
        %s569 = ssub.s32 %s27, 1
        // Predicated region
        $region13: #{predict_sentiment.1} parent=11 // pred_check
          %p570 = pneg %p65
        $region14: #{predict_sentiment.1} parent=11 // pred_check_branch
          %572 = sbr.rel (%p570) target = $region16
        $region15: #{predict_sentiment.1} parent=11 // pred_region
          %s573 = smul.u32 2, %s36
          %p574 = scmp.lt.s32.totalorder %s573, 1
          %s575 = scalar_select %p574, %s573, 1
          %s576 = smul.addr %s575, 8
          %s577 = scalar_lea.vmem %s0, %s576
          %s578 = smul.u32 2, %s36
        $region16: #{predict_sentiment.1} parent=11 // pred_fallthru
          _
        // Predicated region
        $region17: #{predict_sentiment.1} parent=11 // pred_check
          %p579 = pneg %p91
        $region18: #{predict_sentiment.1} parent=11 // pred_check_branch
          %581 = sbr.rel (%p579) target = $region20
        $region19: #{predict_sentiment.1} parent=11 // pred_region
          %s582 = smul.u32 2, %s36
          %p583 = scmp.lt.s32.totalorder %s582, 1
          %s584 = scalar_select %p583, %s582, 1
          %s585 = scalar_lea.vmem %s1, %s584
          %s586 = smul.u32 2, %s36
        $region20: #{predict_sentiment.1} parent=11 // pred_fallthru
          _
        // Predicated region
        $region21: #{predict_sentiment.1} parent=11 // pred_check
          %p587 = pneg %p112
        $region22: #{predict_sentiment.1} parent=11 // pred_check_branch
          %589 = sbr.rel (%p587) target = $region24
        $region23: #{predict_sentiment.1} parent=11 // pred_region
          _
        $region24: #{predict_sentiment.1} parent=11 // pred_fallthru
          _
        // Predicated region
        $region25: #{predict_sentiment.1} parent=11 // pred_check
          %p590 = pneg %p133
        $region26: #{predict_sentiment.1} parent=11 // pred_check_branch
          %592 = sbr.rel (%p590) target = $region28
        $region27: #{predict_sentiment.1} parent=11 // pred_region
          _
        $region28: #{predict_sentiment.1} parent=11 // pred_fallthru
          _
        // Predicated region
        $region29: #{predict_sentiment.1} parent=11 // pred_check
          %p593 = pneg %p466
        $region30: #{predict_sentiment.1} parent=11 // pred_check_branch
          %595 = sbr.rel (%p593) target = $region32
        $region31: #{predict_sentiment.1} parent=11 // pred_region
          _
        $region32: #{predict_sentiment.1} parent=11 // pred_fallthru
          _
        // Predicated region
        $region33: #{predict_sentiment.1} parent=11 // pred_check
          %p596 = pneg %p487
        $region34: #{predict_sentiment.1} parent=11 // pred_check_branch
          %598 = sbr.rel (%p596) target = $region36
        $region35: #{predict_sentiment.1} parent=11 // pred_region
          _
        $region36: #{predict_sentiment.1} parent=11 // pred_fallthru
          _
        // Predicated region
        $region37: #{predict_sentiment.1} parent=11 // pred_check
          %p599 = pneg %p508
        $region38: #{predict_sentiment.1} parent=11 // pred_check_branch
          %601 = sbr.rel (%p599) target = $region40
        $region39: #{predict_sentiment.1} parent=11 // pred_region
          _
        $region40: #{predict_sentiment.1} parent=11 // pred_fallthru
          _
        // Predicated region
        $region41: #{predict_sentiment.1} parent=11 // pred_check
          %p602 = pneg %p529
        $region42: #{predict_sentiment.1} parent=11 // pred_check_branch
          %604 = sbr.rel (%p602) target = $region44
        $region43: #{predict_sentiment.1} parent=11 // pred_region
          _
        $region44: #{predict_sentiment.1} parent=11 // pred_fallthru
          _
      $region12: #{predict_sentiment.1} parent=5 // pred_fallthru
        _
      %p605 = scmp.lt.s32.totalorder %s27, 2
      // Predicated region
      $region45: #{predict_sentiment.1} parent=5 // pred_check
        %p606 = pneg %p605
      $region46: #{predict_sentiment.1} parent=5 // pred_check_branch
        %608 = sbr.rel (%p606) target = $region48
      $region47: #{predict_sentiment.1} parent=5 // pred_region
        // Predicated region
        $region49: #{predict_sentiment.1} parent=47 // pred_check
          %p609 = pneg %p153
        $region50: #{predict_sentiment.1} parent=47 // pred_check_branch
          %611 = sbr.rel (%p609) target = $region52
        $region51: #{predict_sentiment.1} parent=47 // pred_region
          %p612 = scmp.lt.s32.totalorder %s35, 1
          %s613 = scalar_select %p612, %s35, 1
          %s614 = smul.addr %s613, 4
          %s615 = smul.addr %s614, 4
          %s616 = scalar_lea.vmem %s4, %s615
        $region52: #{predict_sentiment.1} parent=47 // pred_fallthru
          _
        // Predicated region
        $region53: #{predict_sentiment.1} parent=47 // pred_check
          %p617 = pneg %p179
        $region54: #{predict_sentiment.1} parent=47 // pred_check_branch
          %619 = sbr.rel (%p617) target = $region56
        $region55: #{predict_sentiment.1} parent=47 // pred_region
          %p620 = scmp.lt.s32.totalorder %s35, 1
          %s621 = scalar_select %p620, %s35, 1
          %s622 = scalar_lea.vmem %s5, %s621
        $region56: #{predict_sentiment.1} parent=47 // pred_fallthru
          _
        // Predicated region
        $region57: #{predict_sentiment.1} parent=47 // pred_check
          %p623 = pneg %p205
        $region58: #{predict_sentiment.1} parent=47 // pred_check_branch
          %625 = sbr.rel (%p623) target = $region60
        $region59: #{predict_sentiment.1} parent=47 // pred_region
          %p626 = scmp.lt.s32.totalorder %s35, 1
          %s627 = scalar_select %p626, %s35, 1
          %s628 = smul.addr %s627, 4
          %s629 = smul.addr %s628, 4
          %s630 = scalar_lea.vmem %s6, %s629
        $region60: #{predict_sentiment.1} parent=47 // pred_fallthru
          _
        // Predicated region
        $region61: #{predict_sentiment.1} parent=47 // pred_check
          %p631 = pneg %p231
        $region62: #{predict_sentiment.1} parent=47 // pred_check_branch
          %633 = sbr.rel (%p631) target = $region64
        $region63: #{predict_sentiment.1} parent=47 // pred_region
          %p634 = scmp.lt.s32.totalorder %s35, 1
          %s635 = scalar_select %p634, %s35, 1
          %s636 = scalar_lea.vmem %s7, %s635
        $region64: #{predict_sentiment.1} parent=47 // pred_fallthru
          _
        // Predicated region
        $region65: #{predict_sentiment.1} parent=47 // pred_check
          %p637 = pneg %p257
        $region66: #{predict_sentiment.1} parent=47 // pred_check_branch
          %639 = sbr.rel (%p637) target = $region68
        $region67: #{predict_sentiment.1} parent=47 // pred_region
          %p640 = scmp.lt.s32.totalorder %s35, 1
          %s641 = scalar_select %p640, %s35, 1
          %s642 = scalar_lea.vmem %s8, %s641
        $region68: #{predict_sentiment.1} parent=47 // pred_fallthru
          _
        // Predicated region
        $region69: #{predict_sentiment.1} parent=47 // pred_check
          %p643 = pneg %p283
        $region70: #{predict_sentiment.1} parent=47 // pred_check_branch
          %645 = sbr.rel (%p643) target = $region72
        $region71: #{predict_sentiment.1} parent=47 // pred_region
          %p646 = scmp.lt.s32.totalorder %s35, 1
          %s647 = scalar_select %p646, %s35, 1
          %s648 = scalar_lea.vmem %s9, %s647
        $region72: #{predict_sentiment.1} parent=47 // pred_fallthru
          _
        // Predicated region
        $region73: #{predict_sentiment.1} parent=47 // pred_check
          %p649 = pneg %p309
        $region74: #{predict_sentiment.1} parent=47 // pred_check_branch
          %651 = sbr.rel (%p649) target = $region76
        $region75: #{predict_sentiment.1} parent=47 // pred_region
          %p652 = scmp.lt.s32.totalorder %s35, 1
          %s653 = scalar_select %p652, %s35, 1
          %s654 = smul.addr %s653, 4
          %s655 = smul.addr %s654, 4
          %s656 = scalar_lea.vmem %s10, %s655
        $region76: #{predict_sentiment.1} parent=47 // pred_fallthru
          _
        // Predicated region
        $region77: #{predict_sentiment.1} parent=47 // pred_check
          %p657 = pneg %p335
        $region78: #{predict_sentiment.1} parent=47 // pred_check_branch
          %659 = sbr.rel (%p657) target = $region80
        $region79: #{predict_sentiment.1} parent=47 // pred_region
          %p660 = scmp.lt.s32.totalorder %s35, 1
          %s661 = scalar_select %p660, %s35, 1
          %s662 = scalar_lea.vmem %s11, %s661
        $region80: #{predict_sentiment.1} parent=47 // pred_fallthru
          _
        // Predicated region
        $region81: #{predict_sentiment.1} parent=47 // pred_check
          %p663 = pneg %p361
        $region82: #{predict_sentiment.1} parent=47 // pred_check_branch
          %665 = sbr.rel (%p663) target = $region84
        $region83: #{predict_sentiment.1} parent=47 // pred_region
          %p666 = scmp.lt.s32.totalorder %s35, 1
          %s667 = scalar_select %p666, %s35, 1
          %s668 = smul.addr %s667, 8
          %s669 = smul.addr %s668, 4
          %s670 = scalar_lea.vmem %s12, %s669
        $region84: #{predict_sentiment.1} parent=47 // pred_fallthru
          _
        // Predicated region
        $region85: #{predict_sentiment.1} parent=47 // pred_check
          %p671 = pneg %p387
        $region86: #{predict_sentiment.1} parent=47 // pred_check_branch
          %673 = sbr.rel (%p671) target = $region88
        $region87: #{predict_sentiment.1} parent=47 // pred_region
          %p674 = scmp.lt.s32.totalorder %s35, 1
          %s675 = scalar_select %p674, %s35, 1
          %s676 = scalar_lea.vmem %s13, %s675
        $region88: #{predict_sentiment.1} parent=47 // pred_fallthru
          _
        // Predicated region
        $region89: #{predict_sentiment.1} parent=47 // pred_check
          %p677 = pneg %p413
        $region90: #{predict_sentiment.1} parent=47 // pred_check_branch
          %679 = sbr.rel (%p677) target = $region92
        $region91: #{predict_sentiment.1} parent=47 // pred_region
          %p680 = scmp.lt.s32.totalorder %s35, 1
          %s681 = scalar_select %p680, %s35, 1
          %s682 = scalar_lea.vmem %s14, %s681
        $region92: #{predict_sentiment.1} parent=47 // pred_fallthru
          _
        // Predicated region
        $region93: #{predict_sentiment.1} parent=47 // pred_check
          %p683 = pneg %p439
        $region94: #{predict_sentiment.1} parent=47 // pred_check_branch
          %685 = sbr.rel (%p683) target = $region96
        $region95: #{predict_sentiment.1} parent=47 // pred_region
          %p686 = scmp.lt.s32.totalorder %s35, 1
          %s687 = scalar_select %p686, %s35, 1
          %s688 = scalar_lea.vmem %s15, %s687
        $region96: #{predict_sentiment.1} parent=47 // pred_fallthru
          _
      $region48: #{predict_sentiment.1} parent=5 // pred_fallthru
        _
      %p689 = scmp.le.s32.totalorder 1, %s27
      %p690 = scmp.lt.s32.totalorder %s27, 3
      %p691 = pnand %p689, %p690
      %p692 = pneg %p691
      // Predicated region
      $region97: #{predict_sentiment.1} parent=5 // pred_check
        _
      $region98: #{predict_sentiment.1} parent=5 // pred_check_branch
        %694 = sbr.rel (%p691) target = $region100
      $region99: #{predict_sentiment.1} parent=5 // pred_region
        %s695 = ssub.s32 %s27, 1
        %s696 = smul.u32 2, %s36
        %p697 = scmp.lt.s32.totalorder %s696, 1
        %s698 = scalar_select %p697, %s696, 1
        %s699 = smul.addr %s698, 8
        %s700 = scalar_lea.vmem %s0, %s699
        %p701 = pneg %p65
        %p702 = pneg %p62
        %s703 = smul.u32 2, %s36
        %p704 = scmp.lt.s32.totalorder %s703, 1
        %s705 = scalar_select %p704, %s703, 1
        %s706 = scalar_lea.vmem %s1, %s705
        %p707 = pneg %p91
        %p708 = pneg %p88
        %p709 = pneg %p112
        %p710 = pneg %p109
        %p711 = pneg %p133
        %p712 = pneg %p130
        %p713 = scmp.lt.s32.totalorder %s37, 1
        %s714 = scalar_select %p713, %s37, 1
        %s715 = smul.addr %s714, 4
        %s716 = smul.addr %s715, 4
        %s717 = scalar_lea.vmem %s4, %s716
        %p718 = pneg %p159
        %p719 = pneg %p156
        %p720 = scmp.lt.s32.totalorder %s37, 1
        %s721 = scalar_select %p720, %s37, 1
        %s722 = scalar_lea.vmem %s5, %s721
        %p723 = pneg %p185
        %p724 = pneg %p182
        %p725 = scmp.lt.s32.totalorder %s37, 1
        %s726 = scalar_select %p725, %s37, 1
        %s727 = smul.addr %s726, 4
        %s728 = smul.addr %s727, 4
        %s729 = scalar_lea.vmem %s6, %s728
        %p730 = pneg %p211
        %p731 = pneg %p208
        %p732 = scmp.lt.s32.totalorder %s37, 1
        %s733 = scalar_select %p732, %s37, 1
        %s734 = scalar_lea.vmem %s7, %s733
        %p735 = pneg %p237
        %p736 = pneg %p234
        %p737 = scmp.lt.s32.totalorder %s37, 1
        %s738 = scalar_select %p737, %s37, 1
        %s739 = scalar_lea.vmem %s8, %s738
        %p740 = pneg %p263
        %p741 = pneg %p260
        %p742 = scmp.lt.s32.totalorder %s37, 1
        %s743 = scalar_select %p742, %s37, 1
        %s744 = scalar_lea.vmem %s9, %s743
        %p745 = pneg %p289
        %p746 = pneg %p286
        %p747 = scmp.lt.s32.totalorder %s37, 1
        %s748 = scalar_select %p747, %s37, 1
        %s749 = smul.addr %s748, 4
        %s750 = smul.addr %s749, 4
        %s751 = scalar_lea.vmem %s10, %s750
        %p752 = pneg %p315
        %p753 = pneg %p312
        %p754 = scmp.lt.s32.totalorder %s37, 1
        %s755 = scalar_select %p754, %s37, 1
        %s756 = scalar_lea.vmem %s11, %s755
        %p757 = pneg %p341
        %p758 = pneg %p338
        %p759 = scmp.lt.s32.totalorder %s37, 1
        %s760 = scalar_select %p759, %s37, 1
        %s761 = smul.addr %s760, 8
        %s762 = smul.addr %s761, 4
        %s763 = scalar_lea.vmem %s12, %s762
        %p764 = pneg %p367
        %p765 = pneg %p364
        %p766 = scmp.lt.s32.totalorder %s37, 1
        %s767 = scalar_select %p766, %s37, 1
        %s768 = scalar_lea.vmem %s13, %s767
        %p769 = pneg %p393
        %p770 = pneg %p390
        %p771 = scmp.lt.s32.totalorder %s37, 1
        %s772 = scalar_select %p771, %s37, 1
        %s773 = scalar_lea.vmem %s14, %s772
        %p774 = pneg %p419
        %p775 = pneg %p416
        %p776 = scmp.lt.s32.totalorder %s37, 1
        %s777 = scalar_select %p776, %s37, 1
        %s778 = scalar_lea.vmem %s15, %s777
        %p779 = pneg %p445
        %p780 = pneg %p442
        %p781 = pneg %p466
        %p782 = pneg %p463
        %p783 = pneg %p487
        %p784 = pneg %p484
        %p785 = pneg %p508
        %p786 = pneg %p505
        %p787 = pneg %p529
        %p788 = pneg %p526
        %p789 = pneg %p555
        %p790 = pneg %p552
        %s791 = smul.u32 2, %s36
        %p792 = scmp.lt.s32.totalorder %s791, 1
        %s793 = scalar_select %p792, %s791, 1
        %s794 = smul.addr %s793, 8
        %s795 = scalar_lea.vmem %s0, %s794
        %s796 = smul.u32 2, %s36
        %s797 = smul.u32 2, %s36
        %p798 = scmp.lt.s32.totalorder %s797, 1
        %s799 = scalar_select %p798, %s797, 1
        %s800 = scalar_lea.vmem %s1, %s799
        %s801 = smul.u32 2, %s36
        %p802 = scmp.lt.s32.totalorder %s37, 1
        %s803 = scalar_select %p802, %s37, 1
        %s804 = smul.addr %s803, 4
        %s805 = smul.addr %s804, 4
        %s806 = scalar_lea.vmem %s4, %s805
        %p807 = scmp.lt.s32.totalorder %s37, 1
        %s808 = scalar_select %p807, %s37, 1
        %s809 = scalar_lea.vmem %s5, %s808
        %p810 = scmp.lt.s32.totalorder %s37, 1
        %s811 = scalar_select %p810, %s37, 1
        %s812 = smul.addr %s811, 4
        %s813 = smul.addr %s812, 4
        %s814 = scalar_lea.vmem %s6, %s813
        %p815 = scmp.lt.s32.totalorder %s37, 1
        %s816 = scalar_select %p815, %s37, 1
        %s817 = scalar_lea.vmem %s7, %s816
        %p818 = scmp.lt.s32.totalorder %s37, 1
        %s819 = scalar_select %p818, %s37, 1
        %s820 = scalar_lea.vmem %s8, %s819
        %p821 = scmp.lt.s32.totalorder %s37, 1
        %s822 = scalar_select %p821, %s37, 1
        %s823 = scalar_lea.vmem %s9, %s822
        %p824 = scmp.lt.s32.totalorder %s37, 1
        %s825 = scalar_select %p824, %s37, 1
        %s826 = smul.addr %s825, 4
        %s827 = smul.addr %s826, 4
        %s828 = scalar_lea.vmem %s10, %s827
        %p829 = scmp.lt.s32.totalorder %s37, 1
        %s830 = scalar_select %p829, %s37, 1
        %s831 = scalar_lea.vmem %s11, %s830
        %p832 = scmp.lt.s32.totalorder %s37, 1
        %s833 = scalar_select %p832, %s37, 1
        %s834 = smul.addr %s833, 8
        %s835 = smul.addr %s834, 4
        %s836 = scalar_lea.vmem %s12, %s835
        %p837 = scmp.lt.s32.totalorder %s37, 1
        %s838 = scalar_select %p837, %s37, 1
        %s839 = scalar_lea.vmem %s13, %s838
        %p840 = scmp.lt.s32.totalorder %s37, 1
        %s841 = scalar_select %p840, %s37, 1
        %s842 = scalar_lea.vmem %s14, %s841
        %p843 = scmp.lt.s32.totalorder %s37, 1
        %s844 = scalar_select %p843, %s37, 1
        %s845 = scalar_lea.vmem %s15, %s844
        %p847 = scmp.eq.s32.totalorder %s37, 0
        // Predicated region
        $region101: #{predict_sentiment.1} parent=99 // pred_check
          %p848 = pneg %p847
        $region102: #{predict_sentiment.1} parent=99 // pred_check_branch
          %850 = sbr.rel (%p848) target = $region104
        $region103: #{predict_sentiment.1} parent=99 // pred_region
          %v851 = vld [vmem:[%s795] sm:$0xff]
          %v852 = vld [vmem:[%s795 + $0x8] sm:$0xff]
          %v853 = vld [vmem:[%s2] sm:$0x1]
          %v854 = vld [vmem:[%s3] sm:$0x1]
          %vm855 = vcmask 261120
          %v856 = vsel %vm855, %v851, 0.0
          %857 = vadd.xlane.f32.xlu0 %v856
          %v858 = vpop.xlane.xlu0 %857
          %v859 = vsel %vm855, %v852, 0.0
          %860 = vadd.xlane.f32.xlu0 %v859
          %v861 = vpop.xlane.xlu0 %860
          %v862 = vmul.f32 %v851, %v851
          %v863 = vmul.f32 %v852, %v852
          %v864 = vsel %vm855, %v862, 0.0
          %865 = vadd.xlane.f32.xlu0 %v864
          %v866 = vpop.xlane.xlu0 %865
          %v867 = vsel %vm855, %v863, 0.0
          %868 = vadd.xlane.f32.xlu0 %v867
          %v869 = vpop.xlane.xlu0 %868
          %v870 = vmul.f32 %v858, 0.03125
          %v871 = vmul.f32 %v861, 0.03125
          %v872 = vmul.f32 %v866, 0.03125
          %v873 = vmul.f32 %v869, 0.03125
          %v874 = vmul.f32 %v870, %v870
          %v875 = vmul.f32 %v871, %v871
          %v876 = vsub.f32 %v872, %v874
          %v877 = vsub.f32 %v873, %v875
          %v878 = vsub.f32 %v851, %v870
          %v879 = vsub.f32 %v852, %v871
          %v880 = vadd.f32 %v876, 1e-12
          %v881 = vadd.f32 %v877, 1e-12
          %v882 = vrsqrt.pop %v880
          %v883 = vrsqrt.pop %v881
          %v884 = vmul.f32 %v878, %v882
          %v885 = vmul.f32 %v879, %v883
          %v887 = vlaneseq
          %v888 = vshrl.u32 %v887, 7
          %v889 = vsub.s32 0, %v888
          %v890 = vrot.slane %v853, %v889
          %v892 = vmul.f32 %v884, %v890
          %v893 = vmul.f32 %v885, %v890
          %v895 = vlaneseq
          %v896 = vshrl.u32 %v895, 7
          %v897 = vsub.s32 0, %v896
          %v898 = vrot.slane %v854, %v897
          %v900 = vadd.f32 %v892, %v898
          %v901 = vadd.f32 %v893, %v898
          %902 = vst.msk [vmem:[#allocation2] sm:$0xff] %vm855, %v900
          %903 = vst.msk [vmem:[#allocation2 + $0x8] sm:$0xff] %vm855, %v901
        $region104: #{predict_sentiment.1} parent=99 // pred_fallthru
          _
        %v904 = vld [vmem:[#allocation2] sm:$0xff]
        %v905 = vld [vmem:[#allocation2 + $0x8] sm:$0xff]
        %v906 = vpack.c.bf16 %v905, %v904
        %v907 = vld [vmem:[%s806] sm:$0xf]
        %v908 = vld [vmem:[%s806 + $0x4] sm:$0xf]
        %v909 = vld [vmem:[%s806 + $0x8] sm:$0xf]
        %v910 = vld [vmem:[%s806 + $0xc] sm:$0xf]
        %v911 = vld [vmem:[%s809] sm:$0x1]
        %v913 = vlaneseq
        %v914 = vshrl.u32 %v913, 7
        %v915 = vsub.s32 0, %v914
        %v916 = vrot.slane %v911, %v915
        %v922 = vunpack.c.l.b16 %v907
        %v923 = vunpack.c.l.b16 %v908
        %v924 = vunpack.c.l.b16 %v909
        %v925 = vunpack.c.l.b16 %v910
        %v926 = vpack.c.b16 %v923, %v922
        %v927 = vpack.c.b16 %v925, %v924
        %vm930 = vcmask 261120
        %v932 = vsel %vm930, %v906, 0
        %934 = vmatprep.subr.bf16.mxu0 0
        %935 = vmatpush1.bf16.msra.mxu0 %v926
        %936 = vmatprep.subr.bf16.mxu0 0
        %937 = vmatpush1.bf16.msra.mxu0 %v927
        %938 = vmatprep.subr.bf16.mxu0 0
        %939 = vmatpush1.bf16.msra.mxu0 0
        %940 = vmatprep.subr.bf16.mxu0 0
        %941 = vmatpush1.bf16.msra.mxu0 0
        %942 = vmatprep.subr.bf16.mxu0 0
        %943 = vmatpush1.bf16.msra.mxu0 0
        %944 = vmatprep.subr.bf16.mxu0 0
        %945 = vmatpush1.bf16.msra.mxu0 0
        %946 = vmatprep.subr.bf16.mxu0 0
        %947 = vmatpush1.bf16.msra.mxu0 0
        %948 = vmatprep.subr.bf16.mxu0 0
        %949 = vmatpush1.bf16.msra.mxu0 0
        %950 = vmatprep.subr.bf16.mxu0 0
        %951 = vmatpush1.bf16.msra.mxu0 0
        %952 = vmatprep.subr.bf16.mxu0 0
        %953 = vmatpush1.bf16.msra.mxu0 0
        %954 = vmatprep.subr.bf16.mxu0 0
        %955 = vmatpush1.bf16.msra.mxu0 0
        %956 = vmatprep.subr.bf16.mxu0 0
        %957 = vmatpush1.bf16.msra.mxu0 0
        %958 = vmatprep.subr.bf16.mxu0 0
        %959 = vmatpush1.bf16.msra.mxu0 0
        %960 = vmatprep.subr.bf16.mxu0 0
        %961 = vmatpush1.bf16.msra.mxu0 0
        %962 = vmatprep.subr.bf16.mxu0 0
        %963 = vmatpush1.bf16.msra.mxu0 0
        %964 = vmatprep.subr.bf16.mxu0 0
        %965 = vmatpush1.bf16.msra.mxu0 0
        %966 = vmatprep.mubr.bf16.mxu0 0
        %967 = vmatmul.mubr.bf16.gmra.mrb[0].mxu0 %v932
        %v968 = vpop.f32.mrb[0].mxu0
        %v969 = vadd.f32 %v916, %v968
        %v970 = vpop.f32.mrb[0].mxu0
        %v971 = vpop.f32.mrb[0].mxu0
        %v972 = vadd.f32 %v916, %v971
        %v973 = vpop.f32.mrb[0].mxu0
        %974 = vdwg.mxu0
        %v975 = vmul.f32 %v969, 0.25
        %v976 = vmul.f32 %v972, 0.25
        %v977 = vld [vmem:[%s800] sm:$0x1]
        %v978 = vld [vmem:[%s800 + $0x1] sm:$0x1]
        %v979 = vld [vmem:[%s814] sm:$0xf]
        %v980 = vld [vmem:[%s814 + $0x4] sm:$0xf]
        %v981 = vld [vmem:[%s814 + $0x8] sm:$0xf]
        %v982 = vld [vmem:[%s814 + $0xc] sm:$0xf]
        %v983 = vpack.c.bf16 %v975, %v975
        %v984 = vpack.c.bf16 %v976, %v976
        %v985 = vpack.c.bf16 %v969, %v969
        %v986 = vpack.c.bf16 %v972, %v972
        %v989 = vlaneseq
        %v990 = vshrl.u32 %v989, 7
        %v991 = vsub.s32 0, %v990
        %v992 = vrot.slane %v977, %v991
        %v993 = vlaneseq
        %v994 = vshrl.u32 %v993, 7
        %v995 = vsub.s32 0, %v994
        %v996 = vrot.slane %v978, %v995
        %1000 = vrot.lane.b32.xlu0 %v985, 96
        %v1001 = vpop.permute.xlu0 %1000
        %vm1002 = vcmask 130048
        %v1004 = vsel %vm1002, %v983, 0
        %v1007 = vsel %vm1002, %v1001, 0
        %1009 = vmatprep.subr.bf16.mxu0 0
        %1010 = vmatpush1.bf16.xpose.msra.mxu0 %v1007
        %1011 = vmatprep.subr.bf16.mxu0 0
        %1012 = vmatpush1.bf16.xpose.msra.mxu0 0
        %1013 = vmatprep.subr.bf16.mxu0 0
        %1014 = vmatpush1.bf16.xpose.msra.mxu0 0
        %1015 = vmatprep.subr.bf16.mxu0 0
        %1016 = vmatpush1.bf16.xpose.msra.mxu0 0
        %1017 = vmatprep.subr.bf16.mxu0 0
        %1018 = vmatpush1.bf16.xpose.msra.mxu0 0
        %1019 = vmatprep.subr.bf16.mxu0 0
        %1020 = vmatpush1.bf16.xpose.msra.mxu0 0
        %1021 = vmatprep.subr.bf16.mxu0 0
        %1022 = vmatpush1.bf16.xpose.msra.mxu0 0
        %1023 = vmatprep.subr.bf16.mxu0 0
        %1024 = vmatpush1.bf16.xpose.msra.mxu0 0
        %1025 = vmatprep.subr.bf16.mxu0 0
        %1026 = vmatpush1.bf16.xpose.msra.mxu0 0
        %1027 = vmatprep.subr.bf16.mxu0 0
        %1028 = vmatpush1.bf16.xpose.msra.mxu0 0
        %1029 = vmatprep.subr.bf16.mxu0 0
        %1030 = vmatpush1.bf16.xpose.msra.mxu0 0
        %1031 = vmatprep.subr.bf16.mxu0 0
        %1032 = vmatpush1.bf16.xpose.msra.mxu0 0
        %1033 = vmatprep.subr.bf16.mxu0 0
        %1034 = vmatpush1.bf16.xpose.msra.mxu0 0
        %1035 = vmatprep.subr.bf16.mxu0 0
        %1036 = vmatpush1.bf16.xpose.msra.mxu0 0
        %1037 = vmatprep.subr.bf16.mxu0 0
        %1038 = vmatpush1.bf16.xpose.msra.mxu0 0
        %1039 = vmatprep.subr.bf16.mxu0 0
        %1040 = vmatpush1.bf16.xpose.msra.mxu0 0
        %1041 = vmatprep.mubr.bf16.mxu0 0
        %1042 = vmatmul.mubr.bf16.gmra.mrb[0].mxu0 %v1004
        %v1043 = vpop.f32.mrb[0].mxu0
        %v1044 = vadd.f32 %v992, %v1043
        %v1045 = vpop.f32.mrb[0].mxu0
        %v1046 = vpop.f32.mrb[0].mxu0
        %v1047 = vpop.f32.mrb[0].mxu0
        %1048 = vdwg.mxu0
        %1050 = vrot.lane.b32.xlu0 %v986, 96
        %v1051 = vpop.permute.xlu0 %1050
        %v1053 = vsel %vm1002, %v984, 0
        %v1056 = vsel %vm1002, %v1051, 0
        %1058 = vmatprep.subr.bf16.mxu0 0
        %1059 = vmatpush1.bf16.xpose.msra.mxu0 %v1056
        %1060 = vmatprep.subr.bf16.mxu0 0
        %1061 = vmatpush1.bf16.xpose.msra.mxu0 0
        %1062 = vmatprep.subr.bf16.mxu0 0
        %1063 = vmatpush1.bf16.xpose.msra.mxu0 0
        %1064 = vmatprep.subr.bf16.mxu0 0
        %1065 = vmatpush1.bf16.xpose.msra.mxu0 0
        %1066 = vmatprep.subr.bf16.mxu0 0
        %1067 = vmatpush1.bf16.xpose.msra.mxu0 0
        %1068 = vmatprep.subr.bf16.mxu0 0
        %1069 = vmatpush1.bf16.xpose.msra.mxu0 0
        %1070 = vmatprep.subr.bf16.mxu0 0
        %1071 = vmatpush1.bf16.xpose.msra.mxu0 0
        %1072 = vmatprep.subr.bf16.mxu0 0
        %1073 = vmatpush1.bf16.xpose.msra.mxu0 0
        %1074 = vmatprep.subr.bf16.mxu0 0
        %1075 = vmatpush1.bf16.xpose.msra.mxu0 0
        %1076 = vmatprep.subr.bf16.mxu0 0
        %1077 = vmatpush1.bf16.xpose.msra.mxu0 0
        %1078 = vmatprep.subr.bf16.mxu0 0
        %1079 = vmatpush1.bf16.xpose.msra.mxu0 0
        %1080 = vmatprep.subr.bf16.mxu0 0
        %1081 = vmatpush1.bf16.xpose.msra.mxu0 0
        %1082 = vmatprep.subr.bf16.mxu0 0
        %1083 = vmatpush1.bf16.xpose.msra.mxu0 0
        %1084 = vmatprep.subr.bf16.mxu0 0
        %1085 = vmatpush1.bf16.xpose.msra.mxu0 0
        %1086 = vmatprep.subr.bf16.mxu0 0
        %1087 = vmatpush1.bf16.xpose.msra.mxu0 0
        %1088 = vmatprep.subr.bf16.mxu0 0
        %1089 = vmatpush1.bf16.xpose.msra.mxu0 0
        %1090 = vmatprep.mubr.bf16.mxu0 0
        %1091 = vmatmul.mubr.bf16.gmra.mrb[0].mxu0 %v1053
        %v1092 = vpop.f32.mrb[0].mxu0
        %v1093 = vadd.f32 %v996, %v1092
        %v1094 = vpop.f32.mrb[0].mxu0
        %v1095 = vpop.f32.mrb[0].mxu0
        %v1096 = vpop.f32.mrb[0].mxu0
        %1097 = vdwg.mxu0
        %vm1098 = vcmask 64512
        %v1099 = vsel %vm1098, %v1044, -inf
        %1100 = vmax.xlane.f32.xlu0 %v1099
        %v1101 = vpop.xlane.xlu0 %1100
        %v1102 = vsel %vm1098, %v1093, -inf
        %1103 = vmax.xlane.f32.xlu0 %v1102
        %v1104 = vpop.xlane.xlu0 %1103
        %v1105 = vsub.f32 %v1044, %v1101
        %v1106 = vsub.f32 %v1093, %v1104
        %v1107 = vmul.f32 %v1105, 1.442695
        %v1108 = vpow.pop %v1107
        %v1109 = vmul.f32 %v1106, 1.442695
        %v1110 = vpow.pop %v1109
        %v1111 = vsel %vm1098, %v1108, 0.0
        %1112 = vadd.xlane.f32.xlu0 %v1111
        %v1113 = vpop.xlane.xlu0 %1112
        %v1114 = vsel %vm1098, %v1110, 0.0
        %1115 = vadd.xlane.f32.xlu0 %v1114
        %v1116 = vpop.xlane.xlu0 %1115
        %v1117 = vrcp.pop %v1113
        %v1118 = vrcp.pop %v1116
        %v1119 = vmul.f32 %v1108, %v1117
        %v1120 = vmul.f32 %v1110, %v1118
        %v1121 = vpack.c.bf16 %v1119, %v1119
        %v1122 = vpack.c.bf16 %v1120, %v1120
        %1123 = vrot.lane.b32.xlu0 %v985, 64
        %v1124 = vpop.permute.xlu0 %1123
        %v1126 = vsel %vm1098, %v1121, 0
        %vm1128 = vcmask 1043456
        %v1130 = vsel %vm1128, %v1124, 0
        %1132 = vmatprep.subr.bf16.mxu0 0
        %1133 = vmatpush1.bf16.msra.mxu0 %v1130
        %1134 = vmatprep.subr.bf16.mxu0 0
        %1135 = vmatpush1.bf16.msra.mxu0 0
        %1136 = vmatprep.subr.bf16.mxu0 0
        %1137 = vmatpush1.bf16.msra.mxu0 0
        %1138 = vmatprep.subr.bf16.mxu0 0
        %1139 = vmatpush1.bf16.msra.mxu0 0
        %1140 = vmatprep.subr.bf16.mxu0 0
        %1141 = vmatpush1.bf16.msra.mxu0 0
        %1142 = vmatprep.subr.bf16.mxu0 0
        %1143 = vmatpush1.bf16.msra.mxu0 0
        %1144 = vmatprep.subr.bf16.mxu0 0
        %1145 = vmatpush1.bf16.msra.mxu0 0
        %1146 = vmatprep.subr.bf16.mxu0 0
        %1147 = vmatpush1.bf16.msra.mxu0 0
        %1148 = vmatprep.subr.bf16.mxu0 0
        %1149 = vmatpush1.bf16.msra.mxu0 0
        %1150 = vmatprep.subr.bf16.mxu0 0
        %1151 = vmatpush1.bf16.msra.mxu0 0
        %1152 = vmatprep.subr.bf16.mxu0 0
        %1153 = vmatpush1.bf16.msra.mxu0 0
        %1154 = vmatprep.subr.bf16.mxu0 0
        %1155 = vmatpush1.bf16.msra.mxu0 0
        %1156 = vmatprep.subr.bf16.mxu0 0
        %1157 = vmatpush1.bf16.msra.mxu0 0
        %1158 = vmatprep.subr.bf16.mxu0 0
        %1159 = vmatpush1.bf16.msra.mxu0 0
        %1160 = vmatprep.subr.bf16.mxu0 0
        %1161 = vmatpush1.bf16.msra.mxu0 0
        %1162 = vmatprep.subr.bf16.mxu0 0
        %1163 = vmatpush1.bf16.msra.mxu0 0
        %1164 = vmatprep.mubr.bf16.mxu0 0
        %1165 = vmatmul.mubr.bf16.gmra.mrb[0].mxu0 %v1126
        %v1166 = vpop.f32.mrb[0].mxu0
        %v1167 = vadd.f32 0.0, %v1166
        %v1168 = vpop.f32.mrb[0].mxu0
        %v1169 = vpop.f32.mrb[0].mxu0
        %v1170 = vpop.f32.mrb[0].mxu0
        %1171 = vdwg.mxu0
        %1172 = vrot.lane.b32.xlu0 %v986, 64
        %v1173 = vpop.permute.xlu0 %1172
        %v1175 = vsel %vm1098, %v1122, 0
        %v1178 = vsel %vm1128, %v1173, 0
        %1180 = vmatprep.subr.bf16.mxu0 0
        %1181 = vmatpush1.bf16.msra.mxu0 %v1178
        %1182 = vmatprep.subr.bf16.mxu0 0
        %1183 = vmatpush1.bf16.msra.mxu0 0
        %1184 = vmatprep.subr.bf16.mxu0 0
        %1185 = vmatpush1.bf16.msra.mxu0 0
        %1186 = vmatprep.subr.bf16.mxu0 0
        %1187 = vmatpush1.bf16.msra.mxu0 0
        %1188 = vmatprep.subr.bf16.mxu0 0
        %1189 = vmatpush1.bf16.msra.mxu0 0
        %1190 = vmatprep.subr.bf16.mxu0 0
        %1191 = vmatpush1.bf16.msra.mxu0 0
        %1192 = vmatprep.subr.bf16.mxu0 0
        %1193 = vmatpush1.bf16.msra.mxu0 0
        %1194 = vmatprep.subr.bf16.mxu0 0
        %1195 = vmatpush1.bf16.msra.mxu0 0
        %1196 = vmatprep.subr.bf16.mxu0 0
        %1197 = vmatpush1.bf16.msra.mxu0 0
        %1198 = vmatprep.subr.bf16.mxu0 0
        %1199 = vmatpush1.bf16.msra.mxu0 0
        %1200 = vmatprep.subr.bf16.mxu0 0
        %1201 = vmatpush1.bf16.msra.mxu0 0
        %1202 = vmatprep.subr.bf16.mxu0 0
        %1203 = vmatpush1.bf16.msra.mxu0 0
        %1204 = vmatprep.subr.bf16.mxu0 0
        %1205 = vmatpush1.bf16.msra.mxu0 0
        %1206 = vmatprep.subr.bf16.mxu0 0
        %1207 = vmatpush1.bf16.msra.mxu0 0
        %1208 = vmatprep.subr.bf16.mxu0 0
        %1209 = vmatpush1.bf16.msra.mxu0 0
        %1210 = vmatprep.subr.bf16.mxu0 0
        %1211 = vmatpush1.bf16.msra.mxu0 0
        %1212 = vmatprep.mubr.bf16.mxu0 0
        %1213 = vmatmul.mubr.bf16.gmra.mrb[0].mxu0 %v1175
        %v1214 = vpop.f32.mrb[0].mxu0
        %v1215 = vadd.f32 0.0, %v1214
        %v1216 = vpop.f32.mrb[0].mxu0
        %v1217 = vpop.f32.mrb[0].mxu0
        %v1218 = vpop.f32.mrb[0].mxu0
        %1219 = vdwg.mxu0
        %v1220 = vpack.c.bf16 %v1215, %v1167
        %1222 = vrot.lane.b32.xlu0 %v983, 112
        %v1223 = vpop.permute.xlu0 %1222
        %1224 = vrot.lane.b32.xlu0 %v985, 80
        %v1225 = vpop.permute.xlu0 %1224
        %v1227 = vsel %vm1002, %v1223, 0
        %v1230 = vsel %vm1002, %v1225, 0
        %1232 = vmatprep.subr.bf16.mxu0 0
        %1233 = vmatpush1.bf16.xpose.msra.mxu0 %v1230
        %1234 = vmatprep.subr.bf16.mxu0 0
        %1235 = vmatpush1.bf16.xpose.msra.mxu0 0
        %1236 = vmatprep.subr.bf16.mxu0 0
        %1237 = vmatpush1.bf16.xpose.msra.mxu0 0
        %1238 = vmatprep.subr.bf16.mxu0 0
        %1239 = vmatpush1.bf16.xpose.msra.mxu0 0
        %1240 = vmatprep.subr.bf16.mxu0 0
        %1241 = vmatpush1.bf16.xpose.msra.mxu0 0
        %1242 = vmatprep.subr.bf16.mxu0 0
        %1243 = vmatpush1.bf16.xpose.msra.mxu0 0
        %1244 = vmatprep.subr.bf16.mxu0 0
        %1245 = vmatpush1.bf16.xpose.msra.mxu0 0
        %1246 = vmatprep.subr.bf16.mxu0 0
        %1247 = vmatpush1.bf16.xpose.msra.mxu0 0
        %1248 = vmatprep.subr.bf16.mxu0 0
        %1249 = vmatpush1.bf16.xpose.msra.mxu0 0
        %1250 = vmatprep.subr.bf16.mxu0 0
        %1251 = vmatpush1.bf16.xpose.msra.mxu0 0
        %1252 = vmatprep.subr.bf16.mxu0 0
        %1253 = vmatpush1.bf16.xpose.msra.mxu0 0
        %1254 = vmatprep.subr.bf16.mxu0 0
        %1255 = vmatpush1.bf16.xpose.msra.mxu0 0
        %1256 = vmatprep.subr.bf16.mxu0 0
        %1257 = vmatpush1.bf16.xpose.msra.mxu0 0
        %1258 = vmatprep.subr.bf16.mxu0 0
        %1259 = vmatpush1.bf16.xpose.msra.mxu0 0
        %1260 = vmatprep.subr.bf16.mxu0 0
        %1261 = vmatpush1.bf16.xpose.msra.mxu0 0
        %1262 = vmatprep.subr.bf16.mxu0 0
        %1263 = vmatpush1.bf16.xpose.msra.mxu0 0
        %1264 = vmatprep.mubr.bf16.mxu0 0
        %1265 = vmatmul.mubr.bf16.gmra.mrb[0].mxu0 %v1227
        %v1266 = vpop.f32.mrb[0].mxu0
        %v1267 = vadd.f32 %v992, %v1266
        %v1268 = vpop.f32.mrb[0].mxu0
        %v1269 = vpop.f32.mrb[0].mxu0
        %v1270 = vpop.f32.mrb[0].mxu0
        %1271 = vdwg.mxu0
        %1273 = vrot.lane.b32.xlu0 %v984, 112
        %v1274 = vpop.permute.xlu0 %1273
        %1275 = vrot.lane.b32.xlu0 %v986, 80
        %v1276 = vpop.permute.xlu0 %1275
        %v1278 = vsel %vm1002, %v1274, 0
        %v1281 = vsel %vm1002, %v1276, 0
        %1283 = vmatprep.subr.bf16.mxu0 0
        %1284 = vmatpush1.bf16.xpose.msra.mxu0 %v1281
        %1285 = vmatprep.subr.bf16.mxu0 0
        %1286 = vmatpush1.bf16.xpose.msra.mxu0 0
        %1287 = vmatprep.subr.bf16.mxu0 0
        %1288 = vmatpush1.bf16.xpose.msra.mxu0 0
        %1289 = vmatprep.subr.bf16.mxu0 0
        %1290 = vmatpush1.bf16.xpose.msra.mxu0 0
        %1291 = vmatprep.subr.bf16.mxu0 0
        %1292 = vmatpush1.bf16.xpose.msra.mxu0 0
        %1293 = vmatprep.subr.bf16.mxu0 0
        %1294 = vmatpush1.bf16.xpose.msra.mxu0 0
        %1295 = vmatprep.subr.bf16.mxu0 0
        %1296 = vmatpush1.bf16.xpose.msra.mxu0 0
        %1297 = vmatprep.subr.bf16.mxu0 0
        %1298 = vmatpush1.bf16.xpose.msra.mxu0 0
        %1299 = vmatprep.subr.bf16.mxu0 0
        %1300 = vmatpush1.bf16.xpose.msra.mxu0 0
        %1301 = vmatprep.subr.bf16.mxu0 0
        %1302 = vmatpush1.bf16.xpose.msra.mxu0 0
        %1303 = vmatprep.subr.bf16.mxu0 0
        %1304 = vmatpush1.bf16.xpose.msra.mxu0 0
        %1305 = vmatprep.subr.bf16.mxu0 0
        %1306 = vmatpush1.bf16.xpose.msra.mxu0 0
        %1307 = vmatprep.subr.bf16.mxu0 0
        %1308 = vmatpush1.bf16.xpose.msra.mxu0 0
        %1309 = vmatprep.subr.bf16.mxu0 0
        %1310 = vmatpush1.bf16.xpose.msra.mxu0 0
        %1311 = vmatprep.subr.bf16.mxu0 0
        %1312 = vmatpush1.bf16.xpose.msra.mxu0 0
        %1313 = vmatprep.subr.bf16.mxu0 0
        %1314 = vmatpush1.bf16.xpose.msra.mxu0 0
        %1315 = vmatprep.mubr.bf16.mxu0 0
        %1316 = vmatmul.mubr.bf16.gmra.mrb[0].mxu0 %v1278
        %v1317 = vpop.f32.mrb[0].mxu0
        %v1318 = vadd.f32 %v996, %v1317
        %v1319 = vpop.f32.mrb[0].mxu0
        %v1320 = vpop.f32.mrb[0].mxu0
        %v1321 = vpop.f32.mrb[0].mxu0
        %1322 = vdwg.mxu0
        %v1323 = vsel %vm1098, %v1267, -inf
        %1324 = vmax.xlane.f32.xlu0 %v1323
        %v1325 = vpop.xlane.xlu0 %1324
        %v1326 = vsel %vm1098, %v1318, -inf
        %1327 = vmax.xlane.f32.xlu0 %v1326
        %v1328 = vpop.xlane.xlu0 %1327
        %v1329 = vsub.f32 %v1267, %v1325
        %v1330 = vsub.f32 %v1318, %v1328
        %v1331 = vmul.f32 %v1329, 1.442695
        %v1332 = vpow.pop %v1331
        %v1333 = vmul.f32 %v1330, 1.442695
        %v1334 = vpow.pop %v1333
        %v1335 = vsel %vm1098, %v1332, 0.0
        %1336 = vadd.xlane.f32.xlu0 %v1335
        %v1337 = vpop.xlane.xlu0 %1336
        %v1338 = vsel %vm1098, %v1334, 0.0
        %1339 = vadd.xlane.f32.xlu0 %v1338
        %v1340 = vpop.xlane.xlu0 %1339
        %v1341 = vrcp.pop %v1337
        %v1342 = vrcp.pop %v1340
        %v1343 = vmul.f32 %v1332, %v1341
        %v1344 = vmul.f32 %v1334, %v1342
        %v1345 = vpack.c.bf16 %v1343, %v1343
        %v1346 = vpack.c.bf16 %v1344, %v1344
        %1347 = vrot.lane.b32.xlu0 %v985, 48
        %v1348 = vpop.permute.xlu0 %1347
        %v1350 = vsel %vm1098, %v1345, 0
        %v1353 = vsel %vm1128, %v1348, 0
        %1355 = vmatprep.subr.bf16.mxu0 0
        %1356 = vmatpush1.bf16.msra.mxu0 %v1353
        %1357 = vmatprep.subr.bf16.mxu0 0
        %1358 = vmatpush1.bf16.msra.mxu0 0
        %1359 = vmatprep.subr.bf16.mxu0 0
        %1360 = vmatpush1.bf16.msra.mxu0 0
        %1361 = vmatprep.subr.bf16.mxu0 0
        %1362 = vmatpush1.bf16.msra.mxu0 0
        %1363 = vmatprep.subr.bf16.mxu0 0
        %1364 = vmatpush1.bf16.msra.mxu0 0
        %1365 = vmatprep.subr.bf16.mxu0 0
        %1366 = vmatpush1.bf16.msra.mxu0 0
        %1367 = vmatprep.subr.bf16.mxu0 0
        %1368 = vmatpush1.bf16.msra.mxu0 0
        %1369 = vmatprep.subr.bf16.mxu0 0
        %1370 = vmatpush1.bf16.msra.mxu0 0
        %1371 = vmatprep.subr.bf16.mxu0 0
        %1372 = vmatpush1.bf16.msra.mxu0 0
        %1373 = vmatprep.subr.bf16.mxu0 0
        %1374 = vmatpush1.bf16.msra.mxu0 0
        %1375 = vmatprep.subr.bf16.mxu0 0
        %1376 = vmatpush1.bf16.msra.mxu0 0
        %1377 = vmatprep.subr.bf16.mxu0 0
        %1378 = vmatpush1.bf16.msra.mxu0 0
        %1379 = vmatprep.subr.bf16.mxu0 0
        %1380 = vmatpush1.bf16.msra.mxu0 0
        %1381 = vmatprep.subr.bf16.mxu0 0
        %1382 = vmatpush1.bf16.msra.mxu0 0
        %1383 = vmatprep.subr.bf16.mxu0 0
        %1384 = vmatpush1.bf16.msra.mxu0 0
        %1385 = vmatprep.subr.bf16.mxu0 0
        %1386 = vmatpush1.bf16.msra.mxu0 0
        %1387 = vmatprep.mubr.bf16.mxu0 0
        %1388 = vmatmul.mubr.bf16.gmra.mrb[0].mxu0 %v1350
        %v1389 = vpop.f32.mrb[0].mxu0
        %v1390 = vadd.f32 0.0, %v1389
        %v1391 = vpop.f32.mrb[0].mxu0
        %v1392 = vpop.f32.mrb[0].mxu0
        %v1393 = vpop.f32.mrb[0].mxu0
        %1394 = vdwg.mxu0
        %1395 = vrot.lane.b32.xlu0 %v986, 48
        %v1396 = vpop.permute.xlu0 %1395
        %v1398 = vsel %vm1098, %v1346, 0
        %v1401 = vsel %vm1128, %v1396, 0
        %1403 = vmatprep.subr.bf16.mxu0 0
        %1404 = vmatpush1.bf16.msra.mxu0 %v1401
        %1405 = vmatprep.subr.bf16.mxu0 0
        %1406 = vmatpush1.bf16.msra.mxu0 0
        %1407 = vmatprep.subr.bf16.mxu0 0
        %1408 = vmatpush1.bf16.msra.mxu0 0
        %1409 = vmatprep.subr.bf16.mxu0 0
        %1410 = vmatpush1.bf16.msra.mxu0 0
        %1411 = vmatprep.subr.bf16.mxu0 0
        %1412 = vmatpush1.bf16.msra.mxu0 0
        %1413 = vmatprep.subr.bf16.mxu0 0
        %1414 = vmatpush1.bf16.msra.mxu0 0
        %1415 = vmatprep.subr.bf16.mxu0 0
        %1416 = vmatpush1.bf16.msra.mxu0 0
        %1417 = vmatprep.subr.bf16.mxu0 0
        %1418 = vmatpush1.bf16.msra.mxu0 0
        %1419 = vmatprep.subr.bf16.mxu0 0
        %1420 = vmatpush1.bf16.msra.mxu0 0
        %1421 = vmatprep.subr.bf16.mxu0 0
        %1422 = vmatpush1.bf16.msra.mxu0 0
        %1423 = vmatprep.subr.bf16.mxu0 0
        %1424 = vmatpush1.bf16.msra.mxu0 0
        %1425 = vmatprep.subr.bf16.mxu0 0
        %1426 = vmatpush1.bf16.msra.mxu0 0
        %1427 = vmatprep.subr.bf16.mxu0 0
        %1428 = vmatpush1.bf16.msra.mxu0 0
        %1429 = vmatprep.subr.bf16.mxu0 0
        %1430 = vmatpush1.bf16.msra.mxu0 0
        %1431 = vmatprep.subr.bf16.mxu0 0
        %1432 = vmatpush1.bf16.msra.mxu0 0
        %1433 = vmatprep.subr.bf16.mxu0 0
        %1434 = vmatpush1.bf16.msra.mxu0 0
        %1435 = vmatprep.mubr.bf16.mxu0 0
        %1436 = vmatmul.mubr.bf16.gmra.mrb[0].mxu0 %v1398
        %v1437 = vpop.f32.mrb[0].mxu0
        %v1438 = vadd.f32 0.0, %v1437
        %v1439 = vpop.f32.mrb[0].mxu0
        %v1440 = vpop.f32.mrb[0].mxu0
        %v1441 = vpop.f32.mrb[0].mxu0
        %1442 = vdwg.mxu0
        %v1443 = vpack.c.bf16 %v1438, %v1390
        %v1446 = vunpack.c.l.b16 %v981
        %v1447 = vunpack.c.l.b16 %v982
        %v1448 = vpack.c.b16 %v1447, %v1446
        %v1451 = vsel %vm1002, %v1443, 0
        %1453 = vmatprep.subr.bf16.mxu0 0
        %1454 = vmatpush1.bf16.msra.mxu0 %v1448
        %1455 = vmatprep.subr.bf16.mxu0 0
        %1456 = vmatpush1.bf16.msra.mxu0 0
        %1457 = vmatprep.subr.bf16.mxu0 0
        %1458 = vmatpush1.bf16.msra.mxu0 0
        %1459 = vmatprep.subr.bf16.mxu0 0
        %1460 = vmatpush1.bf16.msra.mxu0 0
        %1461 = vmatprep.subr.bf16.mxu0 0
        %1462 = vmatpush1.bf16.msra.mxu0 0
        %1463 = vmatprep.subr.bf16.mxu0 0
        %1464 = vmatpush1.bf16.msra.mxu0 0
        %1465 = vmatprep.subr.bf16.mxu0 0
        %1466 = vmatpush1.bf16.msra.mxu0 0
        %1467 = vmatprep.subr.bf16.mxu0 0
        %1468 = vmatpush1.bf16.msra.mxu0 0
        %1469 = vmatprep.subr.bf16.mxu0 0
        %1470 = vmatpush1.bf16.msra.mxu0 0
        %1471 = vmatprep.subr.bf16.mxu0 0
        %1472 = vmatpush1.bf16.msra.mxu0 0
        %1473 = vmatprep.subr.bf16.mxu0 0
        %1474 = vmatpush1.bf16.msra.mxu0 0
        %1475 = vmatprep.subr.bf16.mxu0 0
        %1476 = vmatpush1.bf16.msra.mxu0 0
        %1477 = vmatprep.subr.bf16.mxu0 0
        %1478 = vmatpush1.bf16.msra.mxu0 0
        %1479 = vmatprep.subr.bf16.mxu0 0
        %1480 = vmatpush1.bf16.msra.mxu0 0
        %1481 = vmatprep.subr.bf16.mxu0 0
        %1482 = vmatpush1.bf16.msra.mxu0 0
        %1483 = vmatprep.subr.bf16.mxu0 0
        %1484 = vmatpush1.bf16.msra.mxu0 0
        %1485 = vmatprep.mubr.bf16.mxu0 0
        %1486 = vmatmul.mubr.bf16.gmra.mrb[0].mxu0 %v1451
        %v1487 = vpop.f32.mrb[0].mxu0
        %v1488 = vadd.f32 0.0, %v1487
        %v1489 = vpop.f32.mrb[0].mxu0
        %v1490 = vpop.f32.mrb[0].mxu0
        %v1491 = vadd.f32 0.0, %v1490
        %v1492 = vpop.f32.mrb[0].mxu0
        %1493 = vdwg.mxu0
        %v1496 = vunpack.c.l.b16 %v979
        %v1497 = vunpack.c.l.b16 %v980
        %v1498 = vpack.c.b16 %v1497, %v1496
        %v1501 = vsel %vm1002, %v1220, 0
        %1503 = vmatprep.subr.bf16.mxu0 0
        %1504 = vmatpush1.bf16.msra.mxu0 %v1498
        %1505 = vmatprep.subr.bf16.mxu0 0
        %1506 = vmatpush1.bf16.msra.mxu0 0
        %1507 = vmatprep.subr.bf16.mxu0 0
        %1508 = vmatpush1.bf16.msra.mxu0 0
        %1509 = vmatprep.subr.bf16.mxu0 0
        %1510 = vmatpush1.bf16.msra.mxu0 0
        %1511 = vmatprep.subr.bf16.mxu0 0
        %1512 = vmatpush1.bf16.msra.mxu0 0
        %1513 = vmatprep.subr.bf16.mxu0 0
        %1514 = vmatpush1.bf16.msra.mxu0 0
        %1515 = vmatprep.subr.bf16.mxu0 0
        %1516 = vmatpush1.bf16.msra.mxu0 0
        %1517 = vmatprep.subr.bf16.mxu0 0
        %1518 = vmatpush1.bf16.msra.mxu0 0
        %1519 = vmatprep.subr.bf16.mxu0 0
        %1520 = vmatpush1.bf16.msra.mxu0 0
        %1521 = vmatprep.subr.bf16.mxu0 0
        %1522 = vmatpush1.bf16.msra.mxu0 0
        %1523 = vmatprep.subr.bf16.mxu0 0
        %1524 = vmatpush1.bf16.msra.mxu0 0
        %1525 = vmatprep.subr.bf16.mxu0 0
        %1526 = vmatpush1.bf16.msra.mxu0 0
        %1527 = vmatprep.subr.bf16.mxu0 0
        %1528 = vmatpush1.bf16.msra.mxu0 0
        %1529 = vmatprep.subr.bf16.mxu0 0
        %1530 = vmatpush1.bf16.msra.mxu0 0
        %1531 = vmatprep.subr.bf16.mxu0 0
        %1532 = vmatpush1.bf16.msra.mxu0 0
        %1533 = vmatprep.subr.bf16.mxu0 0
        %1534 = vmatpush1.bf16.msra.mxu0 0
        %1535 = vmatprep.mubr.bf16.mxu0 0
        %1536 = vmatmul.mubr.bf16.gmra.mrb[0].mxu0 %v1501
        %v1537 = vpop.f32.mrb[0].mxu0
        %v1538 = vadd.f32 %v1488, %v1537
        %v1539 = vpop.f32.mrb[0].mxu0
        %v1540 = vpop.f32.mrb[0].mxu0
        %v1541 = vadd.f32 %v1491, %v1540
        %v1542 = vpop.f32.mrb[0].mxu0
        %1543 = vdwg.mxu0
        %v1544 = vld [vmem:[%s817] sm:$0x1]
        %v1546 = vlaneseq
        %v1547 = vshrl.u32 %v1546, 7
        %v1548 = vsub.s32 0, %v1547
        %v1549 = vrot.slane %v1544, %v1548
        %v1551 = vadd.f32 %v1538, %v1549
        %v1552 = vadd.f32 %v1541, %v1549
        %v1553 = vadd.f32 %v1551, %v904
        %v1554 = vadd.f32 %v1552, %v905
        %v1555 = vld [vmem:[%s820] sm:$0x1]
        %v1556 = vld [vmem:[%s823] sm:$0x1]
        %v1557 = vsel %vm930, %v1553, 0.0
        %1558 = vadd.xlane.f32.xlu0 %v1557
        %v1559 = vpop.xlane.xlu0 %1558
        %v1560 = vsel %vm930, %v1554, 0.0
        %1561 = vadd.xlane.f32.xlu0 %v1560
        %v1562 = vpop.xlane.xlu0 %1561
        %v1563 = vmul.f32 %v1553, %v1553
        %v1564 = vmul.f32 %v1554, %v1554
        %v1565 = vsel %vm930, %v1563, 0.0
        %1566 = vadd.xlane.f32.xlu0 %v1565
        %v1567 = vpop.xlane.xlu0 %1566
        %v1568 = vsel %vm930, %v1564, 0.0
        %1569 = vadd.xlane.f32.xlu0 %v1568
        %v1570 = vpop.xlane.xlu0 %1569
        %v1571 = vmul.f32 %v1559, 0.03125
        %v1572 = vmul.f32 %v1562, 0.03125
        %v1573 = vmul.f32 %v1567, 0.03125
        %v1574 = vmul.f32 %v1570, 0.03125
        %v1575 = vmul.f32 %v1571, %v1571
        %v1576 = vmul.f32 %v1572, %v1572
        %v1577 = vsub.f32 %v1573, %v1575
        %v1578 = vsub.f32 %v1574, %v1576
        %v1579 = vsub.f32 %v1553, %v1571
        %v1580 = vsub.f32 %v1554, %v1572
        %v1581 = vadd.f32 %v1577, 1e-12
        %v1582 = vadd.f32 %v1578, 1e-12
        %v1583 = vrsqrt.pop %v1581
        %v1584 = vrsqrt.pop %v1582
        %v1585 = vmul.f32 %v1579, %v1583
        %v1586 = vmul.f32 %v1580, %v1584
        %v1588 = vlaneseq
        %v1589 = vshrl.u32 %v1588, 7
        %v1590 = vsub.s32 0, %v1589
        %v1591 = vrot.slane %v1555, %v1590
        %v1593 = vmul.f32 %v1585, %v1591
        %v1594 = vmul.f32 %v1586, %v1591
        %v1596 = vlaneseq
        %v1597 = vshrl.u32 %v1596, 7
        %v1598 = vsub.s32 0, %v1597
        %v1599 = vrot.slane %v1556, %v1598
        %v1601 = vadd.f32 %v1593, %v1599
        %v1602 = vadd.f32 %v1594, %v1599
        %v1603 = vpack.c.bf16 %v1602, %v1601
        %v1604 = vld [vmem:[%s828] sm:$0xf]
        %v1605 = vld [vmem:[%s828 + $0x4] sm:$0xf]
        %v1606 = vld [vmem:[%s828 + $0x8] sm:$0xf]
        %v1607 = vld [vmem:[%s828 + $0xc] sm:$0xf]
        %v1608 = vld [vmem:[%s831] sm:$0x1]
        %v1610 = vlaneseq
        %v1611 = vshrl.u32 %v1610, 7
        %v1612 = vsub.s32 0, %v1611
        %v1613 = vrot.slane %v1608, %v1612
        %v1619 = vunpack.c.l.b16 %v1604
        %v1620 = vunpack.c.l.b16 %v1605
        %v1621 = vunpack.c.l.b16 %v1606
        %v1622 = vunpack.c.l.b16 %v1607
        %v1623 = vpack.c.b16 %v1620, %v1619
        %v1624 = vpack.c.b16 %v1622, %v1621
        %v1628 = vsel %vm930, %v1603, 0
        %1630 = vmatprep.subr.bf16.mxu0 0
        %1631 = vmatpush1.bf16.msra.mxu0 %v1623
        %1632 = vmatprep.subr.bf16.mxu0 0
        %1633 = vmatpush1.bf16.msra.mxu0 %v1624
        %1634 = vmatprep.subr.bf16.mxu0 0
        %1635 = vmatpush1.bf16.msra.mxu0 0
        %1636 = vmatprep.subr.bf16.mxu0 0
        %1637 = vmatpush1.bf16.msra.mxu0 0
        %1638 = vmatprep.subr.bf16.mxu0 0
        %1639 = vmatpush1.bf16.msra.mxu0 0
        %1640 = vmatprep.subr.bf16.mxu0 0
        %1641 = vmatpush1.bf16.msra.mxu0 0
        %1642 = vmatprep.subr.bf16.mxu0 0
        %1643 = vmatpush1.bf16.msra.mxu0 0
        %1644 = vmatprep.subr.bf16.mxu0 0
        %1645 = vmatpush1.bf16.msra.mxu0 0
        %1646 = vmatprep.subr.bf16.mxu0 0
        %1647 = vmatpush1.bf16.msra.mxu0 0
        %1648 = vmatprep.subr.bf16.mxu0 0
        %1649 = vmatpush1.bf16.msra.mxu0 0
        %1650 = vmatprep.subr.bf16.mxu0 0
        %1651 = vmatpush1.bf16.msra.mxu0 0
        %1652 = vmatprep.subr.bf16.mxu0 0
        %1653 = vmatpush1.bf16.msra.mxu0 0
        %1654 = vmatprep.subr.bf16.mxu0 0
        %1655 = vmatpush1.bf16.msra.mxu0 0
        %1656 = vmatprep.subr.bf16.mxu0 0
        %1657 = vmatpush1.bf16.msra.mxu0 0
        %1658 = vmatprep.subr.bf16.mxu0 0
        %1659 = vmatpush1.bf16.msra.mxu0 0
        %1660 = vmatprep.subr.bf16.mxu0 0
        %1661 = vmatpush1.bf16.msra.mxu0 0
        %1662 = vmatprep.mubr.bf16.mxu0 0
        %1663 = vmatmul.mubr.bf16.gmra.mrb[0].mxu0 %v1628
        %v1664 = vpop.f32.mrb[0].mxu0
        %v1665 = vadd.f32 %v1613, %v1664
        %v1666 = vpop.f32.mrb[0].mxu0
        %v1667 = vpop.f32.mrb[0].mxu0
        %v1668 = vadd.f32 %v1613, %v1667
        %v1669 = vpop.f32.mrb[0].mxu0
        %1670 = vdwg.mxu0
        %v1671 = vmul.f32 %v1665, 0.5
        %v1672 = vmul.f32 %v1668, 0.5
        %v1673 = vmul.f32 %v1665, 0.044715
        %v1674 = vmul.f32 %v1668, 0.044715
        %v1675 = vmul.f32 %v1673, %v1665
        %v1676 = vmul.f32 %v1674, %v1668
        %v1677 = vmul.f32 %v1675, %v1665
        %v1678 = vmul.f32 %v1676, %v1668
        %v1679 = vadd.f32 %v1665, %v1677
        %v1680 = vadd.f32 %v1668, %v1678
        %v1681 = vmul.f32 %v1679, 0.7978846
        %v1682 = vmul.f32 %v1680, 0.7978846
        %v1683 = vtanh.pop %v1681
        %v1684 = vtanh.pop %v1682
        %v1685 = vadd.f32 %v1683, 1.0
        %v1686 = vadd.f32 %v1684, 1.0
        %v1687 = vmul.f32 %v1671, %v1685
        %v1688 = vmul.f32 %v1672, %v1686
        %v1689 = vpack.c.bf16 %v1688, %v1687
        %v1690 = vld [vmem:[%s836] sm:$0xf]
        %v1691 = vld [vmem:[%s836 + $0x4] sm:$0xf]
        %v1692 = vld [vmem:[%s836 + $0x8] sm:$0xf]
        %v1693 = vld [vmem:[%s836 + $0xc] sm:$0xf]
        %v1694 = vld [vmem:[%s836 + $0x10] sm:$0xf]
        %v1695 = vld [vmem:[%s836 + $0x14] sm:$0xf]
        %v1696 = vld [vmem:[%s836 + $0x18] sm:$0xf]
        %v1697 = vld [vmem:[%s836 + $0x1c] sm:$0xf]
        %v1698 = vld [vmem:[%s839] sm:$0x1]
        %v1700 = vlaneseq
        %v1701 = vshrl.u32 %v1700, 7
        %v1702 = vsub.s32 0, %v1701
        %v1703 = vrot.slane %v1698, %v1702
        %v1713 = vunpack.c.l.b16 %v1690
        %v1714 = vunpack.c.l.b16 %v1691
        %v1715 = vunpack.c.l.b16 %v1692
        %v1716 = vunpack.c.l.b16 %v1693
        %v1717 = vunpack.c.l.b16 %v1694
        %v1718 = vunpack.c.l.b16 %v1695
        %v1719 = vunpack.c.l.b16 %v1696
        %v1720 = vunpack.c.l.b16 %v1697
        %v1721 = vpack.c.b16 %v1714, %v1713
        %v1722 = vpack.c.b16 %v1716, %v1715
        %v1723 = vpack.c.b16 %v1718, %v1717
        %v1724 = vpack.c.b16 %v1720, %v1719
        %vm1729 = vcmask 523264
        %v1731 = vsel %vm1729, %v1689, 0
        %1733 = vmatprep.subr.bf16.mxu0 0
        %1734 = vmatpush1.bf16.msra.mxu0 %v1721
        %1735 = vmatprep.subr.bf16.mxu0 0
        %1736 = vmatpush1.bf16.msra.mxu0 %v1722
        %1737 = vmatprep.subr.bf16.mxu0 0
        %1738 = vmatpush1.bf16.msra.mxu0 %v1723
        %1739 = vmatprep.subr.bf16.mxu0 0
        %1740 = vmatpush1.bf16.msra.mxu0 %v1724
        %1741 = vmatprep.subr.bf16.mxu0 0
        %1742 = vmatpush1.bf16.msra.mxu0 0
        %1743 = vmatprep.subr.bf16.mxu0 0
        %1744 = vmatpush1.bf16.msra.mxu0 0
        %1745 = vmatprep.subr.bf16.mxu0 0
        %1746 = vmatpush1.bf16.msra.mxu0 0
        %1747 = vmatprep.subr.bf16.mxu0 0
        %1748 = vmatpush1.bf16.msra.mxu0 0
        %1749 = vmatprep.subr.bf16.mxu0 0
        %1750 = vmatpush1.bf16.msra.mxu0 0
        %1751 = vmatprep.subr.bf16.mxu0 0
        %1752 = vmatpush1.bf16.msra.mxu0 0
        %1753 = vmatprep.subr.bf16.mxu0 0
        %1754 = vmatpush1.bf16.msra.mxu0 0
        %1755 = vmatprep.subr.bf16.mxu0 0
        %1756 = vmatpush1.bf16.msra.mxu0 0
        %1757 = vmatprep.subr.bf16.mxu0 0
        %1758 = vmatpush1.bf16.msra.mxu0 0
        %1759 = vmatprep.subr.bf16.mxu0 0
        %1760 = vmatpush1.bf16.msra.mxu0 0
        %1761 = vmatprep.subr.bf16.mxu0 0
        %1762 = vmatpush1.bf16.msra.mxu0 0
        %1763 = vmatprep.subr.bf16.mxu0 0
        %1764 = vmatpush1.bf16.msra.mxu0 0
        %1765 = vmatprep.mubr.bf16.mxu0 0
        %1766 = vmatmul.mubr.bf16.gmra.mrb[0].mxu0 %v1731
        %v1767 = vpop.f32.mrb[0].mxu0
        %v1768 = vadd.f32 %v1703, %v1767
        %v1769 = vpop.f32.mrb[0].mxu0
        %v1770 = vpop.f32.mrb[0].mxu0
        %v1771 = vadd.f32 %v1703, %v1770
        %v1772 = vpop.f32.mrb[0].mxu0
        %1773 = vdwg.mxu0
        %v1774 = vadd.f32 %v1768, %v1601
        %v1775 = vadd.f32 %v1771, %v1602
        %v1776 = vld [vmem:[%s842] sm:$0x1]
        %v1777 = vld [vmem:[%s845] sm:$0x1]
        %v1778 = vsel %vm930, %v1774, 0.0
        %1779 = vadd.xlane.f32.xlu0 %v1778
        %v1780 = vpop.xlane.xlu0 %1779
        %v1781 = vsel %vm930, %v1775, 0.0
        %1782 = vadd.xlane.f32.xlu0 %v1781
        %v1783 = vpop.xlane.xlu0 %1782
        %v1784 = vmul.f32 %v1774, %v1774
        %v1785 = vmul.f32 %v1775, %v1775
        %v1786 = vsel %vm930, %v1784, 0.0
        %1787 = vadd.xlane.f32.xlu0 %v1786
        %v1788 = vpop.xlane.xlu0 %1787
        %v1789 = vsel %vm930, %v1785, 0.0
        %1790 = vadd.xlane.f32.xlu0 %v1789
        %v1791 = vpop.xlane.xlu0 %1790
        %v1792 = vmul.f32 %v1780, 0.03125
        %v1793 = vmul.f32 %v1783, 0.03125
        %v1794 = vmul.f32 %v1788, 0.03125
        %v1795 = vmul.f32 %v1791, 0.03125
        %v1796 = vmul.f32 %v1792, %v1792
        %v1797 = vmul.f32 %v1793, %v1793
        %v1798 = vsub.f32 %v1794, %v1796
        %v1799 = vsub.f32 %v1795, %v1797
        %v1800 = vsub.f32 %v1774, %v1792
        %v1801 = vsub.f32 %v1775, %v1793
        %v1802 = vadd.f32 %v1798, 1e-12
        %v1803 = vadd.f32 %v1799, 1e-12
        %v1804 = vrsqrt.pop %v1802
        %v1805 = vrsqrt.pop %v1803
        %v1806 = vmul.f32 %v1800, %v1804
        %v1807 = vmul.f32 %v1801, %v1805
        %v1809 = vlaneseq
        %v1810 = vshrl.u32 %v1809, 7
        %v1811 = vsub.s32 0, %v1810
        %v1812 = vrot.slane %v1776, %v1811
        %v1814 = vmul.f32 %v1806, %v1812
        %v1815 = vmul.f32 %v1807, %v1812
        %v1817 = vlaneseq
        %v1818 = vshrl.u32 %v1817, 7
        %v1819 = vsub.s32 0, %v1818
        %v1820 = vrot.slane %v1777, %v1819
        %v1822 = vadd.f32 %v1814, %v1820
        %v1823 = vadd.f32 %v1815, %v1820
        %1824 = vst.msk [vmem:[#allocation2] sm:$0xff] %vm930, %v1822
        %1825 = vst.msk [vmem:[#allocation2 + $0x8] sm:$0xff] %vm930, %v1823
        %p1826 = scmp.eq.s32.totalorder %s37, 1
        // Predicated region
        $region105: #{predict_sentiment.1} parent=99 // pred_check
          %p1827 = pneg %p1826
        $region106: #{predict_sentiment.1} parent=99 // pred_check_branch
          %1829 = sbr.rel (%p1827) target = $region108
        $region107: #{predict_sentiment.1} parent=99 // pred_region
          %v1830 = vld [vmem:[#allocation2] sm:$0xff]
          %v1831 = vld [vmem:[#allocation2 + $0x8] sm:$0xff]
          %v1832 = vpack.c.bf16 %v1830, %v1830
          %v1833 = vpack.c.bf16 %v1831, %v1831
          %v1834 = vld [vmem:[%s16] sm:$0xf]
          %v1835 = vld [vmem:[%s16 + $0x4] sm:$0xf]
          %v1836 = vld [vmem:[%s16 + $0x8] sm:$0xf]
          %v1837 = vld [vmem:[%s16 + $0xc] sm:$0xf]
          %v1838 = vld [vmem:[%s17] sm:$0x1]
          %v1840 = vlaneseq
          %v1841 = vshrl.u32 %v1840, 7
          %v1842 = vsub.s32 0, %v1841
          %v1843 = vrot.slane %v1838, %v1842
          %v1847 = vunpack.c.l.b16 %v1832
          %v1848 = vunpack.c.l.b16 %v1833
          %v1849 = vrot.slane %v1848, 7
          %vm1850 = vcmask 1041409
          %v1851 = vsel %vm1850, %v1849, %v1847
          %v1852 = vpack.c.b16 %v1851, %v1851
          %v1857 = vunpack.c.l.b16 %v1834
          %v1858 = vunpack.c.l.b16 %v1835
          %v1859 = vunpack.c.l.b16 %v1836
          %v1860 = vunpack.c.l.b16 %v1837
          %v1861 = vpack.c.b16 %v1858, %v1857
          %v1862 = vpack.c.b16 %v1860, %v1859
          %v1866 = vsel %vm930, %v1852, 0
          %1868 = vmatprep.subr.bf16.mxu0 0
          %1869 = vmatpush1.bf16.msra.mxu0 %v1861
          %1870 = vmatprep.subr.bf16.mxu0 0
          %1871 = vmatpush1.bf16.msra.mxu0 %v1862
          %1872 = vmatprep.subr.bf16.mxu0 0
          %1873 = vmatpush1.bf16.msra.mxu0 0
          %1874 = vmatprep.subr.bf16.mxu0 0
          %1875 = vmatpush1.bf16.msra.mxu0 0
          %1876 = vmatprep.subr.bf16.mxu0 0
          %1877 = vmatpush1.bf16.msra.mxu0 0
          %1878 = vmatprep.subr.bf16.mxu0 0
          %1879 = vmatpush1.bf16.msra.mxu0 0
          %1880 = vmatprep.subr.bf16.mxu0 0
          %1881 = vmatpush1.bf16.msra.mxu0 0
          %1882 = vmatprep.subr.bf16.mxu0 0
          %1883 = vmatpush1.bf16.msra.mxu0 0
          %1884 = vmatprep.subr.bf16.mxu0 0
          %1885 = vmatpush1.bf16.msra.mxu0 0
          %1886 = vmatprep.subr.bf16.mxu0 0
          %1887 = vmatpush1.bf16.msra.mxu0 0
          %1888 = vmatprep.subr.bf16.mxu0 0
          %1889 = vmatpush1.bf16.msra.mxu0 0
          %1890 = vmatprep.subr.bf16.mxu0 0
          %1891 = vmatpush1.bf16.msra.mxu0 0
          %1892 = vmatprep.subr.bf16.mxu0 0
          %1893 = vmatpush1.bf16.msra.mxu0 0
          %1894 = vmatprep.subr.bf16.mxu0 0
          %1895 = vmatpush1.bf16.msra.mxu0 0
          %1896 = vmatprep.subr.bf16.mxu0 0
          %1897 = vmatpush1.bf16.msra.mxu0 0
          %1898 = vmatprep.subr.bf16.mxu0 0
          %1899 = vmatpush1.bf16.msra.mxu0 0
          %1900 = vmatprep.mubr.bf16.mxu0 0
          %1901 = vmatmul.mubr.bf16.gmra.mrb[0].mxu0 %v1866
          %v1902 = vpop.f32.mrb[0].mxu0
          %v1903 = vadd.f32 %v1843, %v1902
          %v1904 = vpop.f32.mrb[0].mxu0
          %v1905 = vpop.f32.mrb[0].mxu0
          %v1906 = vpop.f32.mrb[0].mxu0
          %1907 = vdwg.mxu0
          %v1908 = vtanh.pop %v1903
          %v1909 = vpack.c.bf16 %v1908, %v1908
          %v1910 = vld [vmem:[%s18] sm:$0xf]
          %v1911 = vld [vmem:[%s18 + $0x4] sm:$0xf]
          %v1912 = vld [vmem:[%s18 + $0x8] sm:$0xf]
          %v1913 = vld [vmem:[%s18 + $0xc] sm:$0xf]
          %v1914 = vld [vmem:[%s19] sm:$0x1]
          %v1916 = vlaneseq
          %v1917 = vshrl.u32 %v1916, 7
          %v1918 = vsub.s32 0, %v1917
          %v1919 = vrot.slane %v1914, %v1918
          %v1925 = vunpack.c.l.b16 %v1910
          %v1926 = vunpack.c.l.b16 %v1911
          %v1927 = vunpack.c.l.b16 %v1912
          %v1928 = vunpack.c.l.b16 %v1913
          %v1929 = vpack.c.b16 %v1926, %v1925
          %v1930 = vpack.c.b16 %v1928, %v1927
          %v1934 = vsel %vm930, %v1909, 0
          %1936 = vmatprep.subr.bf16.mxu0 0
          %1937 = vmatpush1.bf16.msra.mxu0 %v1929
          %1938 = vmatprep.subr.bf16.mxu0 0
          %1939 = vmatpush1.bf16.msra.mxu0 %v1930
          %1940 = vmatprep.subr.bf16.mxu0 0
          %1941 = vmatpush1.bf16.msra.mxu0 0
          %1942 = vmatprep.subr.bf16.mxu0 0
          %1943 = vmatpush1.bf16.msra.mxu0 0
          %1944 = vmatprep.subr.bf16.mxu0 0
          %1945 = vmatpush1.bf16.msra.mxu0 0
          %1946 = vmatprep.subr.bf16.mxu0 0
          %1947 = vmatpush1.bf16.msra.mxu0 0
          %1948 = vmatprep.subr.bf16.mxu0 0
          %1949 = vmatpush1.bf16.msra.mxu0 0
          %1950 = vmatprep.subr.bf16.mxu0 0
          %1951 = vmatpush1.bf16.msra.mxu0 0
          %1952 = vmatprep.subr.bf16.mxu0 0
          %1953 = vmatpush1.bf16.msra.mxu0 0
          %1954 = vmatprep.subr.bf16.mxu0 0
          %1955 = vmatpush1.bf16.msra.mxu0 0
          %1956 = vmatprep.subr.bf16.mxu0 0
          %1957 = vmatpush1.bf16.msra.mxu0 0
          %1958 = vmatprep.subr.bf16.mxu0 0
          %1959 = vmatpush1.bf16.msra.mxu0 0
          %1960 = vmatprep.subr.bf16.mxu0 0
          %1961 = vmatpush1.bf16.msra.mxu0 0
          %1962 = vmatprep.subr.bf16.mxu0 0
          %1963 = vmatpush1.bf16.msra.mxu0 0
          %1964 = vmatprep.subr.bf16.mxu0 0
          %1965 = vmatpush1.bf16.msra.mxu0 0
          %1966 = vmatprep.subr.bf16.mxu0 0
          %1967 = vmatpush1.bf16.msra.mxu0 0
          %1968 = vmatprep.mubr.bf16.mxu0 0
          %1969 = vmatmul.mubr.bf16.gmra.mrb[0].mxu0 %v1934
          %v1970 = vpop.f32.mrb[0].mxu0
          %v1971 = vadd.f32 %v1919, %v1970
          %v1972 = vpop.f32.mrb[0].mxu0
          %v1973 = vpop.f32.mrb[0].mxu0
          %v1974 = vpop.f32.mrb[0].mxu0
          %1975 = vdwg.mxu0
          %1977 = vrot.lane.b32.xlu0 %v1908, 96
          %v1978 = vpop.permute.xlu0 %1977
          %vm1980 = vcmask 785408
          %v1981 = vsel %vm1980, %v1971, %v1978
          %1982 = vst [vmem:[#allocation3] sm:$0x3] %v1981
        $region108: #{predict_sentiment.1} parent=99 // pred_fallthru
          _
        // Predicated region
        $region109: #{predict_sentiment.1} parent=99 // pred_check
          %p1983 = pneg %p552
        $region110: #{predict_sentiment.1} parent=99 // pred_check_branch
          %1985 = sbr.rel (%p1983) target = $region112
        $region111: #{predict_sentiment.1} parent=99 // pred_region
          %s1987 = ssub.s32 32, 32
          %1988 = vsyncadd [#allocation4], %s1987
          %s1989 = smul.addr %s36, 32
          %s1990 = scalar_lea.hbm %s20, %s1989
          %s1992 = sshll.u32 [#allocation3], 4
          %s1993 = int_to_ptr.vmem [resolvable:$true] %s1992
          %1995 = dma.vmem_to_hbm [thread:$0]  %s1993, 32, %s1990, [#allocation4]
        $region112: #{predict_sentiment.1} parent=99 // pred_fallthru
          _
        // Predicated region
        $region113: #{predict_sentiment.1} parent=99 // pred_check
          %p1996 = pneg %p552
        $region114: #{predict_sentiment.1} parent=99 // pred_check_branch
          %1998 = sbr.rel (%p1996) target = $region116
        $region115: #{predict_sentiment.1} parent=99 // pred_region
          %1999 = dma.done [#allocation4], 32
        $region116: #{predict_sentiment.1} parent=99 // pred_fallthru
          _
      $region100: #{predict_sentiment.1} parent=5 // pred_fallthru
        _
      %p2000 = scmp.le.s32.totalorder 2, %s27
      // Predicated region
      $region117: #{predict_sentiment.1} parent=5 // pred_check
        %p2001 = pneg %p2000
      $region118: #{predict_sentiment.1} parent=5 // pred_check_branch
        %2003 = sbr.rel (%p2001) target = $region120
      $region119: #{predict_sentiment.1} parent=5 // pred_region
        %s2004 = ssub.s32 %s27, 2
      $region120: #{predict_sentiment.1} parent=5 // pred_fallthru
        _
    $region6: #{predict_sentiment.1} parent=1 // loop_footer
      %s31 = sadd.s32 1, %s27
    $region7: #{predict_sentiment.1} parent=1 // loop_footer_branch
      %26 = sbr.rel target = $region3
    $region8: #{predict_sentiment.1} parent=1 // loop_exit
      _
    %2005 = vsyncpa [#allocation4], 1
    %s2006 = scalar_lea.sflag [#allocation4], 1
    %2007 = vsyncpa %s2006, 1

</llo_original>
